<compile_context>
chip_gen: v6e
topology: v6e:2x2x1
jax: 0.10.0
libtpu: 0.0.40
codegen_flags: <defaults>
</compile_context>

<pallas_src>
import random

import jax
import jax.numpy as jnp
import numpy as np
from jax.experimental import pallas as pl
from jax.experimental.pallas import tpu as pltpu

EMB = 16               # embedding dim (encoder and decoder)
HID = 32               # hidden dim (encoder.hid_dim == decoder.hid_dim)
GATES = 3 * HID        # fused [r|z|n] gate width
SRC_VOCAB = 32
TRG_VOCAB = 32         # decoder.output_dim
VPAD = 128             # vocab padded to a full lane width (lane-dense stores)
NEG_INF = -1e30        # bias for the pad lanes -> argmax never picks them


# ----------------------------------------------------------------------------
# Encoder: one fused pallas_call over the whole source sequence
# ----------------------------------------------------------------------------
def encoder_kernel(emb_ref, wih_ref, whh_ref, bih_ref, bhh_ref, h_ref):
    t = pl.program_id(0)

    @pl.when(t == 0)
    def _init():
        h_ref[...] = jnp.zeros_like(h_ref)

    x = emb_ref[0]                     # (B, EMB) current time-step embedding
    h = h_ref[...]                     # (B, HID) previous hidden state

    gi = jnp.dot(x, wih_ref[...], preferred_element_type=jnp.float32) + bih_ref[...]
    gh = jnp.dot(h, whh_ref[...], preferred_element_type=jnp.float32) + bhh_ref[...]

    r = jax.nn.sigmoid(gi[:, 0:HID] + gh[:, 0:HID])
    z = jax.nn.sigmoid(gi[:, HID:2 * HID] + gh[:, HID:2 * HID])
    n = jnp.tanh(gi[:, 2 * HID:GATES] + r * gh[:, 2 * HID:GATES])
    h_ref[...] = (1.0 - z) * n + z * h


def encoder_forward(params, src):
    src_len, B = src.shape
    emb = jnp.take(params["enc_emb"], src, axis=0)            # (src_len, B, EMB)
    bih = jnp.broadcast_to(params["enc_bih"], (B, GATES))     # hoisted broadcast
    bhh = jnp.broadcast_to(params["enc_bhh"], (B, GATES))

    grid_spec = pltpu.PrefetchScalarGridSpec(
        num_scalar_prefetch=0,
        grid=(src_len,),
        in_specs=[
            pl.BlockSpec((1, B, EMB), lambda t: (t, 0, 0)),      # streamed
            pl.BlockSpec((EMB, GATES), lambda t: (0, 0)),        # resident
            pl.BlockSpec((HID, GATES), lambda t: (0, 0)),        # resident
            pl.BlockSpec((B, GATES), lambda t: (0, 0)),          # resident
            pl.BlockSpec((B, GATES), lambda t: (0, 0)),          # resident
        ],
        out_specs=pl.BlockSpec((B, HID), lambda t: (0, 0)),      # hidden carry
    )
    return pl.pallas_call(
        encoder_kernel,
        out_shape=jax.ShapeDtypeStruct((B, HID), jnp.float32),
        grid_spec=grid_spec,
        compiler_params=pltpu.CompilerParams(dimension_semantics=("arbitrary",)),
    )(emb, params["enc_wih"], params["enc_whh"], bih, bhh)


# ----------------------------------------------------------------------------
# Decoder: one fused pallas_call over t = 1 .. trg_len-1
# ----------------------------------------------------------------------------
def decoder_kernel(tf_ref,                         # (T-1,) int32, scalar prefetch (SMEM)
                   trg_oh_ref,                     # (T, B, VPAD) teacher one-hots
                   ctx_ref,                        # (B, HID) encoder context
                   wih_e_ref, wih_c_ref, whh_ref,  # GRU weights (fused gates)
                   bih_ref, bhh_ref,               # GRU biases (pre-broadcast)
                   emb_ref,                        # (VPAD, EMB) padded embedding
                   fc_e_ref, fc_h_ref, fc_c_ref, fc_b_ref,   # fc (padded to VPAD)
                   out_ref,                        # (1, B, VPAD) per-step logits
                   h_s, oh_s, gic_s, fcc_s):       # VMEM scratch
    i = pl.program_id(0)
    B = h_s.shape[0]

    @pl.when(i == 0)
    def _init():
        ctx = ctx_ref[...]
        h_s[...] = ctx                                    # hidden = context
        oh_s[...] = trg_oh_ref[0]                         # input = trg[0]
        # constant context contributions, hoisted out of the time loop
        gic_s[...] = (jnp.dot(ctx, wih_c_ref[...],
                              preferred_element_type=jnp.float32) + bih_ref[...])
        fcc_s[...] = (jnp.dot(ctx, fc_c_ref[...],
                              preferred_element_type=jnp.float32) + fc_b_ref[...])

    onehot = oh_s[...]                                    # (B, VPAD)
    h = h_s[...]                                          # (B, HID)

    # embedding lookup as a one-hot matmul on the MXU
    emb = jnp.dot(onehot, emb_ref[...], preferred_element_type=jnp.float32)  # (B, EMB)

    # GRU step on [emb | ctx] via split matmuls (== concat @ W_ih)
    gi = jnp.dot(emb, wih_e_ref[...], preferred_element_type=jnp.float32) + gic_s[...]
    gh = jnp.dot(h, whh_ref[...], preferred_element_type=jnp.float32) + bhh_ref[...]
    r = jax.nn.sigmoid(gi[:, 0:HID] + gh[:, 0:HID])
    z = jax.nn.sigmoid(gi[:, HID:2 * HID] + gh[:, HID:2 * HID])
    n = jnp.tanh(gi[:, 2 * HID:GATES] + r * gh[:, 2 * HID:GATES])
    h_new = (1.0 - z) * n + z * h
    h_s[...] = h_new

    # fc projection on [emb | h_new | ctx] via split matmuls; pad lanes = -1e30
    logits = (jnp.dot(emb, fc_e_ref[...], preferred_element_type=jnp.float32)
              + jnp.dot(h_new, fc_h_ref[...], preferred_element_type=jnp.float32)
              + fcc_s[...])                               # (B, VPAD)
    out_ref[0] = logits

    # next input: argmax with lowest-index tie-break, vs teacher forcing
    mx = jnp.max(logits, axis=-1, keepdims=True)
    lane = jax.lax.broadcasted_iota(jnp.int32, (B, VPAD), 1)
    amin = jnp.min(jnp.where(logits == mx, lane, VPAD), axis=-1, keepdims=True)
    top1_oh = (lane == amin).astype(jnp.float32)
    teach_oh = trg_oh_ref[i + 1]
    tf = (tf_ref[i] > 0).astype(jnp.float32)
    oh_s[...] = tf * teach_oh + (1.0 - tf) * top1_oh


def decoder_forward(params, trg_onehot, context, tf_mask):
    T, B, _ = trg_onehot.shape
    bih = jnp.broadcast_to(params["dec_bih"], (B, GATES))
    bhh = jnp.broadcast_to(params["dec_bhh"], (B, GATES))
    fcb = jnp.broadcast_to(params["fc_b"], (B, VPAD))

    def resident(shape):
        return pl.BlockSpec(shape, lambda i, tf: (0,) * len(shape))

    grid_spec = pltpu.PrefetchScalarGridSpec(
        num_scalar_prefetch=1,                    # tf_mask -> SMEM
        grid=(T - 1,),
        in_specs=[
            resident((T, B, VPAD)),               # trg one-hots (32 KB, resident)
            resident((B, HID)),                   # context
            resident((EMB, GATES)),               # W_ih (embedding rows)
            resident((HID, GATES)),               # W_ih (context rows)
            resident((HID, GATES)),               # W_hh
            resident((B, GATES)),                 # b_ih (pre-broadcast)
            resident((B, GATES)),                 # b_hh (pre-broadcast)
            resident((VPAD, EMB)),                # decoder embedding (padded rows)
            resident((EMB, VPAD)),                # fc (embedding rows)
            resident((HID, VPAD)),                # fc (hidden rows)
            resident((HID, VPAD)),                # fc (context rows)
            resident((B, VPAD)),                  # fc bias (pad lanes = -1e30)
        ],
        out_specs=pl.BlockSpec((1, B, VPAD), lambda i, tf: (i, 0, 0)),
        scratch_shapes=[
            pltpu.VMEM((B, HID), jnp.float32),    # hidden carry
            pltpu.VMEM((B, VPAD), jnp.float32),   # current-input one-hot
            pltpu.VMEM((B, GATES), jnp.float32),  # ctx @ W_ih_ctx + b_ih (const)
            pltpu.VMEM((B, VPAD), jnp.float32),   # ctx @ fc_ctx + fc_b (const)
        ],
    )
    return pl.pallas_call(
        decoder_kernel,
        out_shape=jax.ShapeDtypeStruct((T - 1, B, VPAD), jnp.float32),
        grid_spec=grid_spec,
        compiler_params=pltpu.CompilerParams(dimension_semantics=("arbitrary",)),
    )(tf_mask, trg_onehot, context,
      params["dec_wih_e"], params["dec_wih_c"], params["dec_whh"], bih, bhh,
      params["dec_emb_pad"], params["fc_e"], params["fc_h"], params["fc_c"], fcb)


# ----------------------------------------------------------------------------
# Full forward (jitted), mirroring the PyTorch seq2seq.forward
# ----------------------------------------------------------------------------
@jax.jit
def seq2seq_forward(params, src, trg, tf_mask):
    trg_len, B = trg.shape
    context = encoder_forward(params, src)                       # (B, HID)
    trg_onehot = jax.nn.one_hot(trg, VPAD, dtype=jnp.float32)    # (T, B, VPAD)
    logits = decoder_forward(params, trg_onehot, context, tf_mask)
    out0 = jnp.zeros((1, B, TRG_VOCAB), jnp.float32)             # outputs[0] == 0
    return jnp.concatenate([out0, logits[:, :, :TRG_VOCAB]], axis=0)


# ----------------------------------------------------------------------------
# Parameters (deterministic, in-script), fused-gate / padded layouts
# ----------------------------------------------------------------------------
def init_params(key):
    ks = jax.random.split(key, 12)

    def u(k, shape, scale):
        return jax.random.uniform(k, shape, jnp.float32, -scale, scale)

    s = 1.0 / float(HID) ** 0.5
    fc_in = EMB + 2 * HID
    s_fc = 1.0 / float(fc_in) ** 0.5

    dec_emb = u(ks[1], (TRG_VOCAB, EMB), 0.1)
    dec_wih = u(ks[6], (EMB + HID, GATES), s)
    fc_w = u(ks[10], (fc_in, TRG_VOCAB), s_fc)
    fc_b = u(ks[11], (1, TRG_VOCAB), s_fc)

    return dict(
        enc_emb=u(ks[0], (SRC_VOCAB, EMB), 0.1),
        enc_wih=u(ks[2], (EMB, GATES), s),
        enc_whh=u(ks[3], (HID, GATES), s),
        enc_bih=u(ks[4], (1, GATES), s),
        enc_bhh=u(ks[5], (1, GATES), s),
        dec_emb_pad=jnp.zeros((VPAD, EMB), jnp.float32).at[:TRG_VOCAB].set(dec_emb),
        dec_wih_e=dec_wih[:EMB],
        dec_wih_c=dec_wih[EMB:],
        dec_whh=u(ks[7], (HID, GATES), s),
        dec_bih=u(ks[8], (1, GATES), s),
        dec_bhh=u(ks[9], (1, GATES), s),
        fc_e=jnp.zeros((EMB, VPAD), jnp.float32).at[:, :TRG_VOCAB].set(fc_w[:EMB]),
        fc_h=jnp.zeros((HID, VPAD), jnp.float32).at[:, :TRG_VOCAB].set(fc_w[EMB:EMB + HID]),
        fc_c=jnp.zeros((HID, VPAD), jnp.float32).at[:, :TRG_VOCAB].set(fc_w[EMB + HID:]),
        fc_b=jnp.full((1, VPAD), NEG_INF, jnp.float32).at[:, :TRG_VOCAB].set(fc_b),
    )


# ----------------------------------------------------------------------------
# Pure-JAX reference (for sanity checks only)
# ----------------------------------------------------------------------------
def _ref_gru_step(x, h, wih, whh, bih, bhh):
    P = jax.lax.Precision.HIGHEST
    gi = jnp.dot(x, wih, precision=P) + bih
    gh = jnp.dot(h, whh, precision=P) + bhh
    r = jax.nn.sigmoid(gi[:, :HID] + gh[:, :HID])
    z = jax.nn.sigmoid(gi[:, HID:2 * HID] + gh[:, HID:2 * HID])
    n = jnp.tanh(gi[:, 2 * HID:] + r * gh[:, 2 * HID:])
    return (1.0 - z) * n + z * h


def _ref_encoder(params, src):
    emb = jnp.take(params["enc_emb"], src, axis=0)
    h = jnp.zeros((src.shape[1], HID), jnp.float32)
    for t in range(src.shape[0]):
        h = _ref_gru_step(emb[t], h, params["enc_wih"], params["enc_whh"],
                          params["enc_bih"], params["enc_bhh"])
    return h


def _ref_first_decoder_step(params, tok0, context):
    P = jax.lax.Precision.HIGHEST
    emb = params["dec_emb_pad"][tok0]                               # (B, EMB)
    wih = jnp.concatenate([params["dec_wih_e"], params["dec_wih_c"]], axis=0)
    x = jnp.concatenate([emb, context], axis=1)
    h1 = _ref_gru_step(x, context, wih, params["dec_whh"],
                       params["dec_bih"], params["dec_bhh"])
    out_cat = jnp.concatenate([emb, h1, context], axis=1)
    fc_w = jnp.concatenate([params["fc_e"], params["fc_h"], params["fc_c"]],
                           axis=0)[:, :TRG_VOCAB]
    return jnp.dot(out_cat, fc_w, precision=P) + params["fc_b"][:, :TRG_VOCAB]


# ----------------------------------------------------------------------------
if __name__ == "__main__":
    key = jax.random.PRNGKey(0)
    pkey, skey, tkey = jax.random.split(key, 3)
    params = init_params(pkey)

    src_len, trg_len, batch = 8, 8, 8
    src = jax.random.randint(skey, (src_len, batch), 0, SRC_VOCAB, dtype=jnp.int32)
    trg = jax.random.randint(tkey, (trg_len, batch), 0, TRG_VOCAB, dtype=jnp.int32)

    # Teacher-forcing decisions: one host-RNG draw per decoder step, like the
    # reference's `random.random() < teacher_f_r` (here deterministic, seed=0).
    rng = random.Random(0)
    tf_mask = jnp.asarray([1 if rng.random() < 0.5 else 0 for _ in range(trg_len - 1)],
                          dtype=jnp.int32)

    out = seq2seq_forward(params, src, trg, tf_mask)
    out = jax.block_until_ready(out)

    assert out.shape == (trg_len, batch, TRG_VOCAB), out.shape
    assert bool(jnp.all(out[0] == 0.0))        # outputs[0] never written (torch.zeros)
    assert bool(jnp.all(jnp.isfinite(out)))

    # Sanity checks vs a plain-JAX reference (loose tol: MXU vs XLA matmul fp).
    ctx_k = jax.block_until_ready(encoder_forward(params, src))
    np.testing.assert_allclose(np.asarray(ctx_k), np.asarray(_ref_encoder(params, src)),
                               atol=0.1, rtol=0.0)
    ref1 = _ref_first_decoder_step(params, trg[0], ctx_k)
    np.testing.assert_allclose(np.asarray(out[1]), np.asarray(ref1), atol=0.1, rtol=0.0)

    print("KERNEL_OK")
</pallas_src>

<mosaic_0001>
module attributes {stable_mosaic.version = 11 : i64} {
  func.func @decoder_kernel(%arg0: i32, %arg1: memref<7xi32, #tpu.memory_space<smem>>, %arg2: memref<8x8x128xf32, #tpu.memory_space<vmem>>, %arg3: memref<8x32xf32, #tpu.memory_space<vmem>>, %arg4: memref<16x96xf32, #tpu.memory_space<vmem>>, %arg5: memref<32x96xf32, #tpu.memory_space<vmem>>, %arg6: memref<32x96xf32, #tpu.memory_space<vmem>>, %arg7: memref<8x96xf32, #tpu.memory_space<vmem>>, %arg8: memref<8x96xf32, #tpu.memory_space<vmem>>, %arg9: memref<128x16xf32, #tpu.memory_space<vmem>>, %arg10: memref<16x128xf32, #tpu.memory_space<vmem>>, %arg11: memref<32x128xf32, #tpu.memory_space<vmem>>, %arg12: memref<32x128xf32, #tpu.memory_space<vmem>>, %arg13: memref<8x128xf32, #tpu.memory_space<vmem>>, %arg14: memref<1x8x128xf32, #tpu.memory_space<vmem>>, %arg15: memref<8x32xf32, #tpu.memory_space<vmem>>, %arg16: memref<8x128xf32, #tpu.memory_space<vmem>>, %arg17: memref<8x96xf32, #tpu.memory_space<vmem>>, %arg18: memref<8x128xf32, #tpu.memory_space<vmem>>) attributes {dimension_semantics = [#tpu.dimension_semantics<arbitrary>], iteration_bounds = array<i64: 7>, scalar_prefetch = 1 : i64, scratch_operands = 4 : i64, tpu.core_type = #tpu.core_type<tc>, window_params = [{pipeline_mode = #tpu.pipeline_mode<synchronous>, transform_indices = @transform_0, window_bounds = array<i64: 8, 8, 128>}, {pipeline_mode = #tpu.pipeline_mode<synchronous>, transform_indices = @transform_1, window_bounds = array<i64: 8, 32>}, {pipeline_mode = #tpu.pipeline_mode<synchronous>, transform_indices = @transform_2, window_bounds = array<i64: 16, 96>}, {pipeline_mode = #tpu.pipeline_mode<synchronous>, transform_indices = @transform_3, window_bounds = array<i64: 32, 96>}, {pipeline_mode = #tpu.pipeline_mode<synchronous>, transform_indices = @transform_4, window_bounds = array<i64: 32, 96>}, {pipeline_mode = #tpu.pipeline_mode<synchronous>, transform_indices = @transform_5, window_bounds = array<i64: 8, 96>}, {pipeline_mode = #tpu.pipeline_mode<synchronous>, transform_indices = @transform_6, window_bounds = array<i64: 8, 96>}, {pipeline_mode = #tpu.pipeline_mode<synchronous>, transform_indices = @transform_7, window_bounds = array<i64: 128, 16>}, {pipeline_mode = #tpu.pipeline_mode<synchronous>, transform_indices = @transform_8, window_bounds = array<i64: 16, 128>}, {pipeline_mode = #tpu.pipeline_mode<synchronous>, transform_indices = @transform_9, window_bounds = array<i64: 32, 128>}, {pipeline_mode = #tpu.pipeline_mode<synchronous>, transform_indices = @transform_10, window_bounds = array<i64: 32, 128>}, {pipeline_mode = #tpu.pipeline_mode<synchronous>, transform_indices = @transform_11, window_bounds = array<i64: 8, 128>}, {transform_indices = @transform_12, window_bounds = array<i64: 1, 8, 128>}]} {
    %c0_i32 = arith.constant 0 : i32
    %0 = arith.cmpi eq, %arg0, %c0_i32 : i32
    %1 = arith.extui %0 : i1 to i32
    %c0_i32_0 = arith.constant 0 : i32
    %2 = arith.cmpi ne, %1, %c0_i32_0 : i32
    scf.if %2 {
      %c0_40 = arith.constant 0 : index
      %c0_41 = arith.constant 0 : index
      %81 = vector.load %arg3[%c0_40, %c0_41] : memref<8x32xf32, #tpu.memory_space<vmem>>, vector<8x32xf32>
      %c0_42 = arith.constant 0 : index
      %c0_43 = arith.constant 0 : index
      %82 = vector.load %arg15[%c0_42, %c0_43] : memref<8x32xf32, #tpu.memory_space<vmem>>, vector<8x32xf32>
      tpu.vector_store %arg15[%c0_42, %c0_43], %81 {strides = array<i32>} : memref<8x32xf32, #tpu.memory_space<vmem>>, vector<8x32xf32>,
      %c0_44 = arith.constant 0 : index
      %c0_45 = arith.constant 0 : index
      %c0_46 = arith.constant 0 : index
      %83 = vector.load %arg2[%c0_44, %c0_45, %c0_46] : memref<8x8x128xf32, #tpu.memory_space<vmem>>, vector<1x8x128xf32>
      %84 = vector.shape_cast %83 : vector<1x8x128xf32> to vector<8x128xf32>
      %c0_47 = arith.constant 0 : index
      %c0_48 = arith.constant 0 : index
      %85 = vector.load %arg16[%c0_47, %c0_48] : memref<8x128xf32, #tpu.memory_space<vmem>>, vector<8x128xf32>
      tpu.vector_store %arg16[%c0_47, %c0_48], %84 {strides = array<i32>} : memref<8x128xf32, #tpu.memory_space<vmem>>, vector<8x128xf32>,
      %c0_49 = arith.constant 0 : index
      %c0_50 = arith.constant 0 : index
      %86 = vector.load %arg5[%c0_49, %c0_50] : memref<32x96xf32, #tpu.memory_space<vmem>>, vector<32x96xf32>
      %cst_51 = arith.constant dense<0.000000e+00> : vector<8x96xf32>
      %87 = tpu.matmul %81, %86, %cst_51 {dimension_numbers = #tpu.dot_dimension_numbers<[1], [0], [0], [1], [0, 0, 1, 1], [], []>} : vector<8x32xf32>, vector<32x96xf32>, vector<8x96xf32> -> vector<8x96xf32>
      %c0_52 = arith.constant 0 : index
      %c0_53 = arith.constant 0 : index
      %88 = vector.load %arg7[%c0_52, %c0_53] : memref<8x96xf32, #tpu.memory_space<vmem>>, vector<8x96xf32>
      %89 = arith.addf %87, %88 : vector<8x96xf32>
      %c0_54 = arith.constant 0 : index
      %c0_55 = arith.constant 0 : index
      %90 = vector.load %arg17[%c0_54, %c0_55] : memref<8x96xf32, #tpu.memory_space<vmem>>, vector<8x96xf32>
      tpu.vector_store %arg17[%c0_54, %c0_55], %89 {strides = array<i32>} : memref<8x96xf32, #tpu.memory_space<vmem>>, vector<8x96xf32>,
      %c0_56 = arith.constant 0 : index
      %c0_57 = arith.constant 0 : index
      %91 = vector.load %arg12[%c0_56, %c0_57] : memref<32x128xf32, #tpu.memory_space<vmem>>, vector<32x128xf32>
      %cst_58 = arith.constant dense<0.000000e+00> : vector<8x128xf32>
      %92 = tpu.matmul %81, %91, %cst_58 {dimension_numbers = #tpu.dot_dimension_numbers<[1], [0], [0], [1], [0, 0, 1, 1], [], []>} : vector<8x32xf32>, vector<32x128xf32>, vector<8x128xf32> -> vector<8x128xf32>
      %c0_59 = arith.constant 0 : index
      %c0_60 = arith.constant 0 : index
      %93 = vector.load %arg13[%c0_59, %c0_60] : memref<8x128xf32, #tpu.memory_space<vmem>>, vector<8x128xf32>
      %94 = arith.addf %92, %93 : vector<8x128xf32>
      %c0_61 = arith.constant 0 : index
      %c0_62 = arith.constant 0 : index
      %95 = vector.load %arg18[%c0_61, %c0_62] : memref<8x128xf32, #tpu.memory_space<vmem>>, vector<8x128xf32>
      tpu.vector_store %arg18[%c0_61, %c0_62], %94 {strides = array<i32>} : memref<8x128xf32, #tpu.memory_space<vmem>>, vector<8x128xf32>,
    } else {
    }
    %c0 = arith.constant 0 : index
    %c0_1 = arith.constant 0 : index
    %3 = vector.load %arg16[%c0, %c0_1] : memref<8x128xf32, #tpu.memory_space<vmem>>, vector<8x128xf32>
    %c0_2 = arith.constant 0 : index
    %c0_3 = arith.constant 0 : index
    %4 = vector.load %arg15[%c0_2, %c0_3] : memref<8x32xf32, #tpu.memory_space<vmem>>, vector<8x32xf32>
    %c0_4 = arith.constant 0 : index
    %c0_5 = arith.constant 0 : index
    %5 = vector.load %arg9[%c0_4, %c0_5] : memref<128x16xf32, #tpu.memory_space<vmem>>, vector<128x16xf32>
    %cst = arith.constant dense<0.000000e+00> : vector<8x16xf32>
    %6 = tpu.matmul %3, %5, %cst {dimension_numbers = #tpu.dot_dimension_numbers<[1], [0], [0], [1], [0, 0, 1, 1], [], []>} : vector<8x128xf32>, vector<128x16xf32>, vector<8x16xf32> -> vector<8x16xf32>
    %c0_6 = arith.constant 0 : index
    %c0_7 = arith.constant 0 : index
    %7 = vector.load %arg4[%c0_6, %c0_7] : memref<16x96xf32, #tpu.memory_space<vmem>>, vector<16x96xf32>
    %cst_8 = arith.constant dense<0.000000e+00> : vector<8x96xf32>
    %8 = tpu.matmul %6, %7, %cst_8 {dimension_numbers = #tpu.dot_dimension_numbers<[1], [0], [0], [1], [0, 0, 1, 1], [], []>} : vector<8x16xf32>, vector<16x96xf32>, vector<8x96xf32> -> vector<8x96xf32>
    %c0_9 = arith.constant 0 : index
    %c0_10 = arith.constant 0 : index
    %9 = vector.load %arg17[%c0_9, %c0_10] : memref<8x96xf32, #tpu.memory_space<vmem>>, vector<8x96xf32>
    %10 = arith.addf %8, %9 : vector<8x96xf32>
    %c0_11 = arith.constant 0 : index
    %c0_12 = arith.constant 0 : index
    %11 = vector.load %arg6[%c0_11, %c0_12] : memref<32x96xf32, #tpu.memory_space<vmem>>, vector<32x96xf32>
    %cst_13 = arith.constant dense<0.000000e+00> : vector<8x96xf32>
    %12 = tpu.matmul %4, %11, %cst_13 {dimension_numbers = #tpu.dot_dimension_numbers<[1], [0], [0], [1], [0, 0, 1, 1], [], []>} : vector<8x32xf32>, vector<32x96xf32>, vector<8x96xf32> -> vector<8x96xf32>
    %c0_14 = arith.constant 0 : index
    %c0_15 = arith.constant 0 : index
    %13 = vector.load %arg8[%c0_14, %c0_15] : memref<8x96xf32, #tpu.memory_space<vmem>>, vector<8x96xf32>
    %14 = arith.addf %12, %13 : vector<8x96xf32>
    %15 = vector.extract_strided_slice %10 {offsets = [0, 0], sizes = [8, 32], strides = [1, 1]} : vector<8x96xf32> to vector<8x32xf32>
    %16 = vector.extract_strided_slice %14 {offsets = [0, 0], sizes = [8, 32], strides = [1, 1]} : vector<8x96xf32> to vector<8x32xf32>
    %17 = arith.addf %15, %16 : vector<8x32xf32>
    %18 = arith.negf %17 : vector<8x32xf32>
    %19 = math.exp %18 : vector<8x32xf32>
    %cst_16 = arith.constant 1.000000e+00 : f32
    %20 = vector.broadcast %cst_16 : f32 to vector<8x32xf32>
    %21 = arith.addf %20, %19 : vector<8x32xf32>
    %22 = arith.divf %20, %21 : vector<8x32xf32>
    %23 = vector.extract_strided_slice %10 {offsets = [0, 32], sizes = [8, 32], strides = [1, 1]} : vector<8x96xf32> to vector<8x32xf32>
    %24 = vector.extract_strided_slice %14 {offsets = [0, 32], sizes = [8, 32], strides = [1, 1]} : vector<8x96xf32> to vector<8x32xf32>
    %25 = arith.addf %23, %24 : vector<8x32xf32>
    %26 = arith.negf %25 : vector<8x32xf32>
    %27 = math.exp %26 : vector<8x32xf32>
    %cst_17 = arith.constant 1.000000e+00 : f32
    %28 = vector.broadcast %cst_17 : f32 to vector<8x32xf32>
    %29 = arith.addf %28, %27 : vector<8x32xf32>
    %30 = arith.divf %28, %29 : vector<8x32xf32>
    %31 = vector.extract_strided_slice %10 {offsets = [0, 64], sizes = [8, 32], strides = [1, 1]} : vector<8x96xf32> to vector<8x32xf32>
    %32 = vector.extract_strided_slice %14 {offsets = [0, 64], sizes = [8, 32], strides = [1, 1]} : vector<8x96xf32> to vector<8x32xf32>
    %33 = arith.mulf %22, %32 : vector<8x32xf32>
    %34 = arith.addf %31, %33 : vector<8x32xf32>
    %35 = math.tanh %34 : vector<8x32xf32>
    %cst_18 = arith.constant 1.000000e+00 : f32
    %36 = vector.broadcast %cst_18 : f32 to vector<8x32xf32>
    %37 = arith.subf %36, %30 : vector<8x32xf32>
    %38 = arith.mulf %37, %35 : vector<8x32xf32>
    %39 = arith.mulf %30, %4 : vector<8x32xf32>
    %40 = arith.addf %38, %39 : vector<8x32xf32>
    %c0_19 = arith.constant 0 : index
    %c0_20 = arith.constant 0 : index
    %41 = vector.load %arg15[%c0_19, %c0_20] : memref<8x32xf32, #tpu.memory_space<vmem>>, vector<8x32xf32>
    tpu.vector_store %arg15[%c0_19, %c0_20], %40 {strides = array<i32>} : memref<8x32xf32, #tpu.memory_space<vmem>>, vector<8x32xf32>,
    %c0_21 = arith.constant 0 : index
    %c0_22 = arith.constant 0 : index
    %42 = vector.load %arg10[%c0_21, %c0_22] : memref<16x128xf32, #tpu.memory_space<vmem>>, vector<16x128xf32>
    %cst_23 = arith.constant dense<0.000000e+00> : vector<8x128xf32>
    %43 = tpu.matmul %6, %42, %cst_23 {dimension_numbers = #tpu.dot_dimension_numbers<[1], [0], [0], [1], [0, 0, 1, 1], [], []>} : vector<8x16xf32>, vector<16x128xf32>, vector<8x128xf32> -> vector<8x128xf32>
    %c0_24 = arith.constant 0 : index
    %c0_25 = arith.constant 0 : index
    %44 = vector.load %arg11[%c0_24, %c0_25] : memref<32x128xf32, #tpu.memory_space<vmem>>, vector<32x128xf32>
    %cst_26 = arith.constant dense<0.000000e+00> : vector<8x128xf32>
    %45 = tpu.matmul %40, %44, %cst_26 {dimension_numbers = #tpu.dot_dimension_numbers<[1], [0], [0], [1], [0, 0, 1, 1], [], []>} : vector<8x32xf32>, vector<32x128xf32>, vector<8x128xf32> -> vector<8x128xf32>
    %46 = arith.addf %43, %45 : vector<8x128xf32>
    %c0_27 = arith.constant 0 : index
    %c0_28 = arith.constant 0 : index
    %47 = vector.load %arg18[%c0_27, %c0_28] : memref<8x128xf32, #tpu.memory_space<vmem>>, vector<8x128xf32>
    %48 = arith.addf %46, %47 : vector<8x128xf32>
    %c0_29 = arith.constant 0 : index
    %c0_30 = arith.constant 0 : index
    %c0_31 = arith.constant 0 : index
    %49 = vector.load %arg14[%c0_29, %c0_30, %c0_31] : memref<1x8x128xf32, #tpu.memory_space<vmem>>, vector<1x8x128xf32>
    %50 = vector.shape_cast %49 : vector<1x8x128xf32> to vector<8x128xf32>
    %51 = vector.shape_cast %48 : vector<8x128xf32> to vector<1x8x128xf32>
    tpu.vector_store %arg14[%c0_29, %c0_30, %c0_31], %51 {strides = array<i32>} : memref<1x8x128xf32, #tpu.memory_space<vmem>>, vector<1x8x128xf32>,
    %cst_32 = arith.constant dense<0xFF800000> : vector<8xf32>
    %52 = vector.multi_reduction <maximumf>, %48, %cst_32 [1] : vector<8x128xf32> to vector<8xf32>
    %53 = vector.shape_cast %52 : vector<8xf32> to vector<8x1xf32>
    %54 = tpu.iota {dimensions = array<i32: 1>} : vector<8x128xi32>
    %55 = vector.broadcast %53 : vector<8x1xf32> to vector<8x128xf32>
    %56 = arith.cmpf oeq, %48, %55 : vector<8x128xf32>
    %c128_i32 = arith.constant 128 : i32
    %57 = vector.broadcast %c128_i32 : i32 to vector<8x128xi32>
    %58 = arith.select %56, %54, %57 : vector<8x128xi1>, vector<8x128xi32>
    %cst_33 = arith.constant dense<2147483647> : vector<8xi32>
    %59 = vector.multi_reduction <minsi>, %58, %cst_33 [1] : vector<8x128xi32> to vector<8xi32>
    %60 = vector.shape_cast %59 : vector<8xi32> to vector<8x1xi32>
    %61 = vector.broadcast %60 : vector<8x1xi32> to vector<8x128xi32>
    %62 = arith.cmpi eq, %54, %61 : vector<8x128xi32>
    %63 = arith.extui %62 : vector<8x128xi1> to vector<8x128xi32>
    %64 = arith.sitofp %63 : vector<8x128xi32> to vector<8x128xf32>
    %c1_i32 = arith.constant 1 : i32
    %65 = arith.addi %arg0, %c1_i32 : i32
    %66 = arith.index_cast %65 : i32 to index
    %c0_34 = arith.constant 0 : index
    %c0_35 = arith.constant 0 : index
    %67 = vector.load %arg2[%66, %c0_34, %c0_35] : memref<8x8x128xf32, #tpu.memory_space<vmem>>, vector<1x8x128xf32>
    %68 = vector.shape_cast %67 : vector<1x8x128xf32> to vector<8x128xf32>
    %69 = arith.index_cast %arg0 : i32 to index
    %70 = memref.load %arg1[%69] : memref<7xi32, #tpu.memory_space<smem>>
    %c0_i32_36 = arith.constant 0 : i32
    %71 = arith.cmpi sgt, %70, %c0_i32_36 : i32
    %72 = arith.extui %71 : i1 to i32
    %73 = arith.sitofp %72 : i32 to f32
    %74 = vector.broadcast %73 : f32 to vector<8x128xf32>
    %75 = arith.mulf %74, %68 : vector<8x128xf32>
    %cst_37 = arith.constant 1.000000e+00 : f32
    %76 = arith.subf %cst_37, %73 : f32
    %77 = vector.broadcast %76 : f32 to vector<8x128xf32>
    %78 = arith.mulf %77, %64 : vector<8x128xf32>
    %79 = arith.addf %75, %78 : vector<8x128xf32>
    %c0_38 = arith.constant 0 : index
    %c0_39 = arith.constant 0 : index
    %80 = vector.load %arg16[%c0_38, %c0_39] : memref<8x128xf32, #tpu.memory_space<vmem>>, vector<8x128xf32>
    tpu.vector_store %arg16[%c0_38, %c0_39], %79 {strides = array<i32>} : memref<8x128xf32, #tpu.memory_space<vmem>>, vector<8x128xf32>,
    return
  }
  func.func @transform_0(%arg0: i32, %arg1: memref<7xi32, #tpu.memory_space<smem>>) -> (i32, i32, i32) {
    %c0_i32 = arith.constant 0 : i32
    %c0_i32_0 = arith.constant 0 : i32
    %c0_i32_1 = arith.constant 0 : i32
    %c0_i32_2 = arith.constant 0 : i32
    return %c0_i32, %c0_i32_0, %c0_i32_1 : i32, i32, i32
  }
  func.func @transform_1(%arg0: i32, %arg1: memref<7xi32, #tpu.memory_space<smem>>) -> (i32, i32) {
    %c0_i32 = arith.constant 0 : i32
    %c0_i32_0 = arith.constant 0 : i32
    %c0_i32_1 = arith.constant 0 : i32
    return %c0_i32, %c0_i32_0 : i32, i32
  }
  func.func @transform_2(%arg0: i32, %arg1: memref<7xi32, #tpu.memory_space<smem>>) -> (i32, i32) {
    %c0_i32 = arith.constant 0 : i32
    %c0_i32_0 = arith.constant 0 : i32
    %c0_i32_1 = arith.constant 0 : i32
    return %c0_i32, %c0_i32_0 : i32, i32
  }
  func.func @transform_3(%arg0: i32, %arg1: memref<7xi32, #tpu.memory_space<smem>>) -> (i32, i32) {
    %c0_i32 = arith.constant 0 : i32
    %c0_i32_0 = arith.constant 0 : i32
    %c0_i32_1 = arith.constant 0 : i32
    return %c0_i32, %c0_i32_0 : i32, i32
  }
  func.func @transform_4(%arg0: i32, %arg1: memref<7xi32, #tpu.memory_space<smem>>) -> (i32, i32) {
    %c0_i32 = arith.constant 0 : i32
    %c0_i32_0 = arith.constant 0 : i32
    %c0_i32_1 = arith.constant 0 : i32
    return %c0_i32, %c0_i32_0 : i32, i32
  }
  func.func @transform_5(%arg0: i32, %arg1: memref<7xi32, #tpu.memory_space<smem>>) -> (i32, i32) {
    %c0_i32 = arith.constant 0 : i32
    %c0_i32_0 = arith.constant 0 : i32
    %c0_i32_1 = arith.constant 0 : i32
    return %c0_i32, %c0_i32_0 : i32, i32
  }
  func.func @transform_6(%arg0: i32, %arg1: memref<7xi32, #tpu.memory_space<smem>>) -> (i32, i32) {
    %c0_i32 = arith.constant 0 : i32
    %c0_i32_0 = arith.constant 0 : i32
    %c0_i32_1 = arith.constant 0 : i32
    return %c0_i32, %c0_i32_0 : i32, i32
  }
  func.func @transform_7(%arg0: i32, %arg1: memref<7xi32, #tpu.memory_space<smem>>) -> (i32, i32) {
    %c0_i32 = arith.constant 0 : i32
    %c0_i32_0 = arith.constant 0 : i32
    %c0_i32_1 = arith.constant 0 : i32
    return %c0_i32, %c0_i32_0 : i32, i32
  }
  func.func @transform_8(%arg0: i32, %arg1: memref<7xi32, #tpu.memory_space<smem>>) -> (i32, i32) {
    %c0_i32 = arith.constant 0 : i32
    %c0_i32_0 = arith.constant 0 : i32
    %c0_i32_1 = arith.constant 0 : i32
    return %c0_i32, %c0_i32_0 : i32, i32
  }
  func.func @transform_9(%arg0: i32, %arg1: memref<7xi32, #tpu.memory_space<smem>>) -> (i32, i32) {
    %c0_i32 = arith.constant 0 : i32
    %c0_i32_0 = arith.constant 0 : i32
    %c0_i32_1 = arith.constant 0 : i32
    return %c0_i32, %c0_i32_0 : i32, i32
  }
  func.func @transform_10(%arg0: i32, %arg1: memref<7xi32, #tpu.memory_space<smem>>) -> (i32, i32) {
    %c0_i32 = arith.constant 0 : i32
    %c0_i32_0 = arith.constant 0 : i32
    %c0_i32_1 = arith.constant 0 : i32
    return %c0_i32, %c0_i32_0 : i32, i32
  }
  func.func @transform_11(%arg0: i32, %arg1: memref<7xi32, #tpu.memory_space<smem>>) -> (i32, i32) {
    %c0_i32 = arith.constant 0 : i32
    %c0_i32_0 = arith.constant 0 : i32
    %c0_i32_1 = arith.constant 0 : i32
    return %c0_i32, %c0_i32_0 : i32, i32
  }
  func.func @transform_12(%arg0: i32, %arg1: memref<7xi32, #tpu.memory_space<smem>>) -> (i32, i32, i32) {
    %c0_i32 = arith.constant 0 : i32
    %c0_i32_0 = arith.constant 0 : i32
    %c0_i32_1 = arith.constant 0 : i32
    return %arg0, %c0_i32, %c0_i32_0 : i32, i32, i32
  }
}

module attributes {stable_mosaic.version = 11 : i64} {
  func.func @encoder_kernel(%arg0: i32, %arg1: memref<1x8x16xf32, #tpu.memory_space<vmem>>, %arg2: memref<16x96xf32, #tpu.memory_space<vmem>>, %arg3: memref<32x96xf32, #tpu.memory_space<vmem>>, %arg4: memref<8x96xf32, #tpu.memory_space<vmem>>, %arg5: memref<8x96xf32, #tpu.memory_space<vmem>>, %arg6: memref<8x32xf32, #tpu.memory_space<vmem>>) attributes {dimension_semantics = [#tpu.dimension_semantics<arbitrary>], iteration_bounds = array<i64: 8>, scalar_prefetch = 0 : i64, scratch_operands = 0 : i64, tpu.core_type = #tpu.core_type<tc>, window_params = [{transform_indices = @transform_0, window_bounds = array<i64: 1, 8, 16>}, {pipeline_mode = #tpu.pipeline_mode<synchronous>, transform_indices = @transform_1, window_bounds = array<i64: 16, 96>}, {pipeline_mode = #tpu.pipeline_mode<synchronous>, transform_indices = @transform_2, window_bounds = array<i64: 32, 96>}, {pipeline_mode = #tpu.pipeline_mode<synchronous>, transform_indices = @transform_3, window_bounds = array<i64: 8, 96>}, {pipeline_mode = #tpu.pipeline_mode<synchronous>, transform_indices = @transform_4, window_bounds = array<i64: 8, 96>}, {pipeline_mode = #tpu.pipeline_mode<synchronous>, transform_indices = @transform_5, window_bounds = array<i64: 8, 32>}]} {
    %c0_i32 = arith.constant 0 : i32
    %0 = arith.cmpi eq, %arg0, %c0_i32 : i32
    %1 = arith.extui %0 : i1 to i32
    %c0_i32_0 = arith.constant 0 : i32
    %2 = arith.cmpi ne, %1, %c0_i32_0 : i32
    scf.if %2 {
      %cst_19 = arith.constant 0.000000e+00 : f32
      %41 = vector.broadcast %cst_19 : f32 to vector<8x32xf32>
      %c0_20 = arith.constant 0 : index
      %c0_21 = arith.constant 0 : index
      %42 = vector.load %arg6[%c0_20, %c0_21] : memref<8x32xf32, #tpu.memory_space<vmem>>, vector<8x32xf32>
      tpu.vector_store %arg6[%c0_20, %c0_21], %41 {strides = array<i32>} : memref<8x32xf32, #tpu.memory_space<vmem>>, vector<8x32xf32>,
    } else {
    }
    %c0 = arith.constant 0 : index
    %c0_1 = arith.constant 0 : index
    %c0_2 = arith.constant 0 : index
    %3 = vector.load %arg1[%c0, %c0_1, %c0_2] : memref<1x8x16xf32, #tpu.memory_space<vmem>>, vector<1x8x16xf32>
    %4 = vector.shape_cast %3 : vector<1x8x16xf32> to vector<8x16xf32>
    %c0_3 = arith.constant 0 : index
    %c0_4 = arith.constant 0 : index
    %5 = vector.load %arg6[%c0_3, %c0_4] : memref<8x32xf32, #tpu.memory_space<vmem>>, vector<8x32xf32>
    %c0_5 = arith.constant 0 : index
    %c0_6 = arith.constant 0 : index
    %6 = vector.load %arg2[%c0_5, %c0_6] : memref<16x96xf32, #tpu.memory_space<vmem>>, vector<16x96xf32>
    %cst = arith.constant dense<0.000000e+00> : vector<8x96xf32>
    %7 = tpu.matmul %4, %6, %cst {dimension_numbers = #tpu.dot_dimension_numbers<[1], [0], [0], [1], [0, 0, 1, 1], [], []>} : vector<8x16xf32>, vector<16x96xf32>, vector<8x96xf32> -> vector<8x96xf32>
    %c0_7 = arith.constant 0 : index
    %c0_8 = arith.constant 0 : index
    %8 = vector.load %arg4[%c0_7, %c0_8] : memref<8x96xf32, #tpu.memory_space<vmem>>, vector<8x96xf32>
    %9 = arith.addf %7, %8 : vector<8x96xf32>
    %c0_9 = arith.constant 0 : index
    %c0_10 = arith.constant 0 : index
    %10 = vector.load %arg3[%c0_9, %c0_10] : memref<32x96xf32, #tpu.memory_space<vmem>>, vector<32x96xf32>
    %cst_11 = arith.constant dense<0.000000e+00> : vector<8x96xf32>
    %11 = tpu.matmul %5, %10, %cst_11 {dimension_numbers = #tpu.dot_dimension_numbers<[1], [0], [0], [1], [0, 0, 1, 1], [], []>} : vector<8x32xf32>, vector<32x96xf32>, vector<8x96xf32> -> vector<8x96xf32>
    %c0_12 = arith.constant 0 : index
    %c0_13 = arith.constant 0 : index
    %12 = vector.load %arg5[%c0_12, %c0_13] : memref<8x96xf32, #tpu.memory_space<vmem>>, vector<8x96xf32>
    %13 = arith.addf %11, %12 : vector<8x96xf32>
    %14 = vector.extract_strided_slice %9 {offsets = [0, 0], sizes = [8, 32], strides = [1, 1]} : vector<8x96xf32> to vector<8x32xf32>
    %15 = vector.extract_strided_slice %13 {offsets = [0, 0], sizes = [8, 32], strides = [1, 1]} : vector<8x96xf32> to vector<8x32xf32>
    %16 = arith.addf %14, %15 : vector<8x32xf32>
    %17 = arith.negf %16 : vector<8x32xf32>
    %18 = math.exp %17 : vector<8x32xf32>
    %cst_14 = arith.constant 1.000000e+00 : f32
    %19 = vector.broadcast %cst_14 : f32 to vector<8x32xf32>
    %20 = arith.addf %19, %18 : vector<8x32xf32>
    %21 = arith.divf %19, %20 : vector<8x32xf32>
    %22 = vector.extract_strided_slice %9 {offsets = [0, 32], sizes = [8, 32], strides = [1, 1]} : vector<8x96xf32> to vector<8x32xf32>
    %23 = vector.extract_strided_slice %13 {offsets = [0, 32], sizes = [8, 32], strides = [1, 1]} : vector<8x96xf32> to vector<8x32xf32>
    %24 = arith.addf %22, %23 : vector<8x32xf32>
    %25 = arith.negf %24 : vector<8x32xf32>
    %26 = math.exp %25 : vector<8x32xf32>
    %cst_15 = arith.constant 1.000000e+00 : f32
    %27 = vector.broadcast %cst_15 : f32 to vector<8x32xf32>
    %28 = arith.addf %27, %26 : vector<8x32xf32>
    %29 = arith.divf %27, %28 : vector<8x32xf32>
    %30 = vector.extract_strided_slice %9 {offsets = [0, 64], sizes = [8, 32], strides = [1, 1]} : vector<8x96xf32> to vector<8x32xf32>
    %31 = vector.extract_strided_slice %13 {offsets = [0, 64], sizes = [8, 32], strides = [1, 1]} : vector<8x96xf32> to vector<8x32xf32>
    %32 = arith.mulf %21, %31 : vector<8x32xf32>
    %33 = arith.addf %30, %32 : vector<8x32xf32>
    %34 = math.tanh %33 : vector<8x32xf32>
    %cst_16 = arith.constant 1.000000e+00 : f32
    %35 = vector.broadcast %cst_16 : f32 to vector<8x32xf32>
    %36 = arith.subf %35, %29 : vector<8x32xf32>
    %37 = arith.mulf %36, %34 : vector<8x32xf32>
    %38 = arith.mulf %29, %5 : vector<8x32xf32>
    %39 = arith.addf %37, %38 : vector<8x32xf32>
    %c0_17 = arith.constant 0 : index
    %c0_18 = arith.constant 0 : index
    %40 = vector.load %arg6[%c0_17, %c0_18] : memref<8x32xf32, #tpu.memory_space<vmem>>, vector<8x32xf32>
    tpu.vector_store %arg6[%c0_17, %c0_18], %39 {strides = array<i32>} : memref<8x32xf32, #tpu.memory_space<vmem>>, vector<8x32xf32>,
    return
  }
  func.func @transform_0(%arg0: i32) -> (i32, i32, i32) {
    %c0_i32 = arith.constant 0 : i32
    %c0_i32_0 = arith.constant 0 : i32
    %c0_i32_1 = arith.constant 0 : i32
    return %arg0, %c0_i32, %c0_i32_0 : i32, i32, i32
  }
  func.func @transform_1(%arg0: i32) -> (i32, i32) {
    %c0_i32 = arith.constant 0 : i32
    %c0_i32_0 = arith.constant 0 : i32
    %c0_i32_1 = arith.constant 0 : i32
    return %c0_i32, %c0_i32_0 : i32, i32
  }
  func.func @transform_2(%arg0: i32) -> (i32, i32) {
    %c0_i32 = arith.constant 0 : i32
    %c0_i32_0 = arith.constant 0 : i32
    %c0_i32_1 = arith.constant 0 : i32
    return %c0_i32, %c0_i32_0 : i32, i32
  }
  func.func @transform_3(%arg0: i32) -> (i32, i32) {
    %c0_i32 = arith.constant 0 : i32
    %c0_i32_0 = arith.constant 0 : i32
    %c0_i32_1 = arith.constant 0 : i32
    return %c0_i32, %c0_i32_0 : i32, i32
  }
  func.func @transform_4(%arg0: i32) -> (i32, i32) {
    %c0_i32 = arith.constant 0 : i32
    %c0_i32_0 = arith.constant 0 : i32
    %c0_i32_1 = arith.constant 0 : i32
    return %c0_i32, %c0_i32_0 : i32, i32
  }
  func.func @transform_5(%arg0: i32) -> (i32, i32) {
    %c0_i32 = arith.constant 0 : i32
    %c0_i32_0 = arith.constant 0 : i32
    %c0_i32_1 = arith.constant 0 : i32
    return %c0_i32, %c0_i32_0 : i32, i32
  }
}

</mosaic_0001>

<llo_original>
// kernel: seq2seq_forward.2
$region0: #{seq2seq_forward.2}
  #allocation0 [shape = 'u32[]', space=smem, size = 0x4, offset = 0x4, fixed_abs, tag = 'smem constant byte address 0x4 - core index']
  #allocation1 [shape = 'u32[144,128]{1,0:T(1,128)}', space=vmem, size = 0x12000, scoped, tag = 'internal scratch']
  %s0 = inlined_call_operand.vmem [shape: f32[8,8,16], index: 0, kind: input, shape index: {}]
  %s1 = inlined_call_operand.vmem [shape: f32[16,96], index: 1, kind: input, shape index: {}]
  %s2 = inlined_call_operand.vmem [shape: f32[32,96], index: 2, kind: input, shape index: {}]
  %s3 = inlined_call_operand.vmem [shape: f32[8,96], index: 3, kind: input, shape index: {}]
  %s4 = inlined_call_operand.vmem [shape: f32[8,96], index: 4, kind: input, shape index: {}]
  %s5 = inlined_call_operand.vmem [shape: f32[8,32], index: 5, kind: output, shape index: {}]
  %s6 = sld [smem:[#allocation0]]
  $region57: #{seq2seq_forward.2} parent=0
    _
  %s8 = ssub.s32 1, %s6
  %s9 = scalar_select 0, %s8, %s6
  loop: start=0, step=1, limit=10
  $region2: #{seq2seq_forward.2} parent=0 // loop_pre_header
    _
  $region3: #{seq2seq_forward.2} parent=0 // loop_header
    %s11 = sphi 0, %s15
    %p12 = scmp.ge.s32.totalorder %s11, 10
    %s21 = sphi 0, %s23
    %s24 = sphi 0, %s21
    %s25 = sphi 0, %s24
    %s41 = sphi 0, %s25
    %s45 = sphi 0, %s45
    %s47 = sphi 0, %s45
    %s48 = sphi 0, %s47
    %s62 = sphi 0, %s48
    %s66 = sphi 0, %s66
    %s68 = sphi 0, %s66
    %s69 = sphi 0, %s68
    %s83 = sphi 0, %s69
    %s87 = sphi 0, %s87
    %s89 = sphi 0, %s87
    %s90 = sphi 0, %s89
    %s104 = sphi 0, %s90
    %s108 = sphi 0, %s108
    %s110 = sphi 0, %s108
    %s111 = sphi 0, %s110
    %s125 = sphi 0, %s111
    %s129 = sphi 0, %s129
    %s131 = sphi 0, %s129
    %s132 = sphi 0, %s131
    %s146 = sphi 0, %s132
  $region4: #{seq2seq_forward.2} parent=0 // loop_header_branch
    %14 = sbr.rel (%p12) target = $region8
  $region5: #{seq2seq_forward.2} parent=0 // loop_body
    %s16 = ssub.s32 %s11, 1
    %s17 = ssub.s32 %s11, 2
    %s18 = sadd.s32 %s11, 1
    %s19 = ssub.s32 %s11, %s18
    %p20 = scmp.eq.s32.totalorder %s19, 0
    %s22 = sadd.s32 %s21, 1
    %s23 = scalar_select %p20, %s21, %s22
    %p26 = pneg %p20
    %p27 = scmp.eq.s32.totalorder %s11, 7
    %p28 = por %p26, %p27
    %p29 = scmp.ne.s32.totalorder %s21, %s24
    %p30 = scmp.eq.s32.totalorder %s11, 0
    %p31 = por %p29, %p30
    %p32 = scmp.ne.s32.totalorder %s21, %s24
    %p33 = scmp.eq.s32.totalorder %s16, 7
    %p34 = por %p32, %p33
    %p35 = scmp.ne.s32.totalorder %s24, %s25
    %p36 = scmp.eq.s32.totalorder %s16, 0
    %p37 = por %p35, %p36
    %p38 = scmp.ne.s32.totalorder %s24, %s25
    %p39 = scmp.eq.s32.totalorder %s17, 7
    %p40 = por %p38, %p39
    %p42 = scmp.ne.s32.totalorder %s25, %s41
    %p43 = scmp.eq.s32.totalorder %s17, 0
    %p44 = por %p42, %p43
    %s46 = sadd.s32 %s45, 1
    %p49 = scmp.eq.s32.totalorder %s11, 7
    %p50 = scmp.ne.s32.totalorder %s45, %s47
    %p51 = scmp.eq.s32.totalorder %s11, 0
    %p52 = por %p50, %p51
    %p53 = scmp.ne.s32.totalorder %s45, %s47
    %p54 = scmp.eq.s32.totalorder %s16, 7
    %p55 = por %p53, %p54
    %p56 = scmp.ne.s32.totalorder %s47, %s48
    %p57 = scmp.eq.s32.totalorder %s16, 0
    %p58 = por %p56, %p57
    %p59 = scmp.ne.s32.totalorder %s47, %s48
    %p60 = scmp.eq.s32.totalorder %s17, 7
    %p61 = por %p59, %p60
    %p63 = scmp.ne.s32.totalorder %s48, %s62
    %p64 = scmp.eq.s32.totalorder %s17, 0
    %p65 = por %p63, %p64
    %s67 = sadd.s32 %s66, 1
    %p70 = scmp.eq.s32.totalorder %s11, 7
    %p71 = scmp.ne.s32.totalorder %s66, %s68
    %p72 = scmp.eq.s32.totalorder %s11, 0
    %p73 = por %p71, %p72
    %p74 = scmp.ne.s32.totalorder %s66, %s68
    %p75 = scmp.eq.s32.totalorder %s16, 7
    %p76 = por %p74, %p75
    %p77 = scmp.ne.s32.totalorder %s68, %s69
    %p78 = scmp.eq.s32.totalorder %s16, 0
    %p79 = por %p77, %p78
    %p80 = scmp.ne.s32.totalorder %s68, %s69
    %p81 = scmp.eq.s32.totalorder %s17, 7
    %p82 = por %p80, %p81
    %p84 = scmp.ne.s32.totalorder %s69, %s83
    %p85 = scmp.eq.s32.totalorder %s17, 0
    %p86 = por %p84, %p85
    %s88 = sadd.s32 %s87, 1
    %p91 = scmp.eq.s32.totalorder %s11, 7
    %p92 = scmp.ne.s32.totalorder %s87, %s89
    %p93 = scmp.eq.s32.totalorder %s11, 0
    %p94 = por %p92, %p93
    %p95 = scmp.ne.s32.totalorder %s87, %s89
    %p96 = scmp.eq.s32.totalorder %s16, 7
    %p97 = por %p95, %p96
    %p98 = scmp.ne.s32.totalorder %s89, %s90
    %p99 = scmp.eq.s32.totalorder %s16, 0
    %p100 = por %p98, %p99
    %p101 = scmp.ne.s32.totalorder %s89, %s90
    %p102 = scmp.eq.s32.totalorder %s17, 7
    %p103 = por %p101, %p102
    %p105 = scmp.ne.s32.totalorder %s90, %s104
    %p106 = scmp.eq.s32.totalorder %s17, 0
    %p107 = por %p105, %p106
    %s109 = sadd.s32 %s108, 1
    %p112 = scmp.eq.s32.totalorder %s11, 7
    %p113 = scmp.ne.s32.totalorder %s108, %s110
    %p114 = scmp.eq.s32.totalorder %s11, 0
    %p115 = por %p113, %p114
    %p116 = scmp.ne.s32.totalorder %s108, %s110
    %p117 = scmp.eq.s32.totalorder %s16, 7
    %p118 = por %p116, %p117
    %p119 = scmp.ne.s32.totalorder %s110, %s111
    %p120 = scmp.eq.s32.totalorder %s16, 0
    %p121 = por %p119, %p120
    %p122 = scmp.ne.s32.totalorder %s110, %s111
    %p123 = scmp.eq.s32.totalorder %s17, 7
    %p124 = por %p122, %p123
    %p126 = scmp.ne.s32.totalorder %s111, %s125
    %p127 = scmp.eq.s32.totalorder %s17, 0
    %p128 = por %p126, %p127
    %s130 = sadd.s32 %s129, 1
    %p133 = scmp.eq.s32.totalorder %s11, 7
    %p134 = scmp.ne.s32.totalorder %s129, %s131
    %p135 = scmp.eq.s32.totalorder %s11, 0
    %p136 = por %p134, %p135
    %p137 = scmp.ne.s32.totalorder %s129, %s131
    %p138 = scmp.eq.s32.totalorder %s16, 7
    %p139 = por %p137, %p138
    %p140 = scmp.ne.s32.totalorder %s131, %s132
    %p141 = scmp.eq.s32.totalorder %s16, 0
    %p142 = por %p140, %p141
    %p143 = scmp.ne.s32.totalorder %s131, %s132
    %p144 = scmp.eq.s32.totalorder %s17, 7
    %p145 = por %p143, %p144
    %p147 = scmp.ne.s32.totalorder %s132, %s146
    %p148 = scmp.eq.s32.totalorder %s17, 0
    %p149 = por %p147, %p148
    %p150 = scmp.le.s32.totalorder 1, %s11
    %p151 = scmp.lt.s32.totalorder %s11, 9
    %p152 = pnand %p150, %p151
    %p153 = pneg %p152
    // Predicated region
    $region9: #{seq2seq_forward.2} parent=5 // pred_check
      _
    $region10: #{seq2seq_forward.2} parent=5 // pred_check_branch
      %155 = sbr.rel (%p152) target = $region12
    $region11: #{seq2seq_forward.2} parent=5 // pred_region
      %s156 = ssub.s32 %s11, 1
      // Predicated region
      $region13: #{seq2seq_forward.2} parent=11 // pred_check
        %p157 = pneg %p58
      $region14: #{seq2seq_forward.2} parent=11 // pred_check_branch
        %159 = sbr.rel (%p157) target = $region16
      $region15: #{seq2seq_forward.2} parent=11 // pred_region
        _
      $region16: #{seq2seq_forward.2} parent=11 // pred_fallthru
        _
      // Predicated region
      $region17: #{seq2seq_forward.2} parent=11 // pred_check
        %p160 = pneg %p79
      $region18: #{seq2seq_forward.2} parent=11 // pred_check_branch
        %162 = sbr.rel (%p160) target = $region20
      $region19: #{seq2seq_forward.2} parent=11 // pred_region
        _
      $region20: #{seq2seq_forward.2} parent=11 // pred_fallthru
        _
      // Predicated region
      $region21: #{seq2seq_forward.2} parent=11 // pred_check
        %p163 = pneg %p100
      $region22: #{seq2seq_forward.2} parent=11 // pred_check_branch
        %165 = sbr.rel (%p163) target = $region24
      $region23: #{seq2seq_forward.2} parent=11 // pred_region
        _
      $region24: #{seq2seq_forward.2} parent=11 // pred_fallthru
        _
      // Predicated region
      $region25: #{seq2seq_forward.2} parent=11 // pred_check
        %p166 = pneg %p121
      $region26: #{seq2seq_forward.2} parent=11 // pred_check_branch
        %168 = sbr.rel (%p166) target = $region28
      $region27: #{seq2seq_forward.2} parent=11 // pred_region
        _
      $region28: #{seq2seq_forward.2} parent=11 // pred_fallthru
        _
    $region12: #{seq2seq_forward.2} parent=5 // pred_fallthru
      _
    %p169 = scmp.lt.s32.totalorder %s11, 8
    // Predicated region
    $region29: #{seq2seq_forward.2} parent=5 // pred_check
      %p170 = pneg %p169
    $region30: #{seq2seq_forward.2} parent=5 // pred_check_branch
      %172 = sbr.rel (%p170) target = $region32
    $region31: #{seq2seq_forward.2} parent=5 // pred_region
      // Predicated region
      $region33: #{seq2seq_forward.2} parent=31 // pred_check
        %p173 = pneg %p31
      $region34: #{seq2seq_forward.2} parent=31 // pred_check_branch
        %175 = sbr.rel (%p173) target = $region36
      $region35: #{seq2seq_forward.2} parent=31 // pred_region
        %p176 = scmp.lt.s32.totalorder %s11, 7
        %s177 = scalar_select %p176, %s11, 7
        %s178 = smul.addr %s177, 8
        %s179 = scalar_lea.vmem %s0, %s178
      $region36: #{seq2seq_forward.2} parent=31 // pred_fallthru
        _
    $region32: #{seq2seq_forward.2} parent=5 // pred_fallthru
      _
    %p180 = scmp.le.s32.totalorder 1, %s11
    %p181 = scmp.lt.s32.totalorder %s11, 9
    %p182 = pnand %p180, %p181
    %p183 = pneg %p182
    // Predicated region
    $region37: #{seq2seq_forward.2} parent=5 // pred_check
      _
    $region38: #{seq2seq_forward.2} parent=5 // pred_check_branch
      %185 = sbr.rel (%p182) target = $region40
    $region39: #{seq2seq_forward.2} parent=5 // pred_region
      %s186 = ssub.s32 %s11, 1
      %p187 = scmp.lt.s32.totalorder %s16, 7
      %s188 = scalar_select %p187, %s16, 7
      %s189 = smul.addr %s188, 8
      %s190 = scalar_lea.vmem %s0, %s189
      %p191 = pneg %p37
      %p192 = pneg %p34
      %p193 = pneg %p58
      %p194 = pneg %p55
      %p195 = pneg %p79
      %p196 = pneg %p76
      %p197 = pneg %p100
      %p198 = pneg %p97
      %p199 = pneg %p121
      %p200 = pneg %p118
      %p201 = pneg %p142
      %p202 = pneg %p139
      %p203 = scmp.lt.s32.totalorder %s16, 7
      %s204 = scalar_select %p203, %s16, 7
      %s205 = smul.addr %s204, 8
      %s206 = scalar_lea.vmem %s0, %s205
      %p207 = scmp.eq.s32.totalorder %s16, 0
      // Predicated region
      $region41: #{seq2seq_forward.2} parent=39 // pred_check
        %p208 = pneg %p207
      $region42: #{seq2seq_forward.2} parent=39 // pred_check_branch
        %210 = sbr.rel (%p208) target = $region44
      $region43: #{seq2seq_forward.2} parent=39 // pred_region
        %vm211 = vcmask 261120
        %212 = vst.msk [vmem:[%s5] sm:$0xff] %vm211, 0.0
      $region44: #{seq2seq_forward.2} parent=39 // pred_fallthru
        _
      %v213 = vld [vmem:[%s206] sm:$0xff]
      %v214 = vld [vmem:[%s5] sm:$0xff]
      %v215 = vld [vmem:[%s1] sm:$0xff]
      %v216 = vld [vmem:[%s1 + $0x8] sm:$0xff]
      %v217 = vld [vmem:[%s3] sm:$0xff]
      %vm218 = vcmask 130048
      %v220 = vsel %vm218, %v213, 0
      %222 = vmatprep.subr.mxu0 0.0
      %223 = vmatpush1.msra.mxu0 0.0
      %224 = vmatprep.subr.mxu0 0.0
      %225 = vmatpush1.msra.mxu0 0.0
      %226 = vmatprep.subr.mxu0 0.0
      %227 = vmatpush1.msra.mxu0 0.0
      %228 = vmatprep.subr.mxu0 0.0
      %229 = vmatpush1.msra.mxu0 0.0
      %230 = vmatprep.subr.mxu0 0.0
      %231 = vmatpush1.msra.mxu0 0.0
      %232 = vmatprep.subr.mxu0 0.0
      %233 = vmatpush1.msra.mxu0 0.0
      %234 = vmatprep.subr.mxu0 0.0
      %235 = vmatpush1.msra.mxu0 0.0
      %236 = vmatprep.subr.mxu0 0.0
      %237 = vmatpush1.msra.mxu0 0.0
      %238 = vmatprep.subr.mxu0 0.0
      %239 = vmatpush1.msra.mxu0 0.0
      %240 = vmatprep.subr.mxu0 0.0
      %241 = vmatpush1.msra.mxu0 0.0
      %242 = vmatprep.subr.mxu0 0.0
      %243 = vmatpush1.msra.mxu0 0.0
      %244 = vmatprep.subr.mxu0 0.0
      %245 = vmatpush1.msra.mxu0 0.0
      %246 = vmatprep.subr.mxu0 0.0
      %247 = vmatpush1.msra.mxu0 0.0
      %248 = vmatprep.subr.mxu0 0.0
      %249 = vmatpush1.msra.mxu0 0.0
      %250 = vmatprep.subr.mxu0 0.0
      %251 = vmatpush1.msra.mxu0 %v216
      %252 = vmatprep.subr.mxu0 0.0
      %253 = vmatpush1.msra.mxu0 %v215
      %254 = vmatprep.subr.mxu0 0.0
      %255 = vmatpush2.msra.mxu0 0.0
      %256 = vmatprep.subr.mxu0 0.0
      %257 = vmatpush2.msra.mxu0 0.0
      %258 = vmatprep.subr.mxu0 0.0
      %259 = vmatpush2.msra.mxu0 0.0
      %260 = vmatprep.subr.mxu0 0.0
      %261 = vmatpush2.msra.mxu0 0.0
      %262 = vmatprep.subr.mxu0 0.0
      %263 = vmatpush2.msra.mxu0 0.0
      %264 = vmatprep.subr.mxu0 0.0
      %265 = vmatpush2.msra.mxu0 0.0
      %266 = vmatprep.subr.mxu0 0.0
      %267 = vmatpush2.msra.mxu0 0.0
      %268 = vmatprep.subr.mxu0 0.0
      %269 = vmatpush2.msra.mxu0 0.0
      %270 = vmatprep.subr.mxu0 0.0
      %271 = vmatpush2.msra.mxu0 0.0
      %272 = vmatprep.subr.mxu0 0.0
      %273 = vmatpush2.msra.mxu0 0.0
      %274 = vmatprep.subr.mxu0 0.0
      %275 = vmatpush2.msra.mxu0 0.0
      %276 = vmatprep.subr.mxu0 0.0
      %277 = vmatpush2.msra.mxu0 0.0
      %278 = vmatprep.subr.mxu0 0.0
      %279 = vmatpush2.msra.mxu0 0.0
      %280 = vmatprep.subr.mxu0 0.0
      %281 = vmatpush2.msra.mxu0 0.0
      %282 = vmatprep.subr.mxu0 0.0
      %283 = vmatpush2.msra.mxu0 0.0
      %284 = vmatprep.subr.mxu0 0.0
      %285 = vmatpush2.msra.mxu0 0.0
      %286 = vmatprep.mubr.f32.mxu0 0.0
      %287 = vmatmul.mubr.f32.gmra.mxu0 %v220
      %v288 = vpop.f32.mrf.mxu0
      %v289 = vadd.f32 %v217, %v288
      %v290 = vpop.f32.mrf.mxu0
      %291 = vdwg.mxu0
      %v292 = vld [vmem:[%s2] sm:$0xff]
      %v293 = vld [vmem:[%s2 + $0x8] sm:$0xff]
      %v294 = vld [vmem:[%s2 + $0x10] sm:$0xff]
      %v295 = vld [vmem:[%s2 + $0x18] sm:$0xff]
      %v296 = vld [vmem:[%s4] sm:$0xff]
      %vm297 = vcmask 261120
      %v299 = vsel %vm297, %v214, 0
      %301 = vmatprep.subr.mxu0 0.0
      %302 = vmatpush1.msra.mxu0 0.0
      %303 = vmatprep.subr.mxu0 0.0
      %304 = vmatpush1.msra.mxu0 0.0
      %305 = vmatprep.subr.mxu0 0.0
      %306 = vmatpush1.msra.mxu0 0.0
      %307 = vmatprep.subr.mxu0 0.0
      %308 = vmatpush1.msra.mxu0 0.0
      %309 = vmatprep.subr.mxu0 0.0
      %310 = vmatpush1.msra.mxu0 0.0
      %311 = vmatprep.subr.mxu0 0.0
      %312 = vmatpush1.msra.mxu0 0.0
      %313 = vmatprep.subr.mxu0 0.0
      %314 = vmatpush1.msra.mxu0 0.0
      %315 = vmatprep.subr.mxu0 0.0
      %316 = vmatpush1.msra.mxu0 0.0
      %317 = vmatprep.subr.mxu0 0.0
      %318 = vmatpush1.msra.mxu0 0.0
      %319 = vmatprep.subr.mxu0 0.0
      %320 = vmatpush1.msra.mxu0 0.0
      %321 = vmatprep.subr.mxu0 0.0
      %322 = vmatpush1.msra.mxu0 0.0
      %323 = vmatprep.subr.mxu0 0.0
      %324 = vmatpush1.msra.mxu0 0.0
      %325 = vmatprep.subr.mxu0 0.0
      %326 = vmatpush1.msra.mxu0 %v295
      %327 = vmatprep.subr.mxu0 0.0
      %328 = vmatpush1.msra.mxu0 %v294
      %329 = vmatprep.subr.mxu0 0.0
      %330 = vmatpush1.msra.mxu0 %v293
      %331 = vmatprep.subr.mxu0 0.0
      %332 = vmatpush1.msra.mxu0 %v292
      %333 = vmatprep.subr.mxu0 0.0
      %334 = vmatpush2.msra.mxu0 0.0
      %335 = vmatprep.subr.mxu0 0.0
      %336 = vmatpush2.msra.mxu0 0.0
      %337 = vmatprep.subr.mxu0 0.0
      %338 = vmatpush2.msra.mxu0 0.0
      %339 = vmatprep.subr.mxu0 0.0
      %340 = vmatpush2.msra.mxu0 0.0
      %341 = vmatprep.subr.mxu0 0.0
      %342 = vmatpush2.msra.mxu0 0.0
      %343 = vmatprep.subr.mxu0 0.0
      %344 = vmatpush2.msra.mxu0 0.0
      %345 = vmatprep.subr.mxu0 0.0
      %346 = vmatpush2.msra.mxu0 0.0
      %347 = vmatprep.subr.mxu0 0.0
      %348 = vmatpush2.msra.mxu0 0.0
      %349 = vmatprep.subr.mxu0 0.0
      %350 = vmatpush2.msra.mxu0 0.0
      %351 = vmatprep.subr.mxu0 0.0
      %352 = vmatpush2.msra.mxu0 0.0
      %353 = vmatprep.subr.mxu0 0.0
      %354 = vmatpush2.msra.mxu0 0.0
      %355 = vmatprep.subr.mxu0 0.0
      %356 = vmatpush2.msra.mxu0 0.0
      %357 = vmatprep.subr.mxu0 0.0
      %358 = vmatpush2.msra.mxu0 0.0
      %359 = vmatprep.subr.mxu0 0.0
      %360 = vmatpush2.msra.mxu0 0.0
      %361 = vmatprep.subr.mxu0 0.0
      %362 = vmatpush2.msra.mxu0 0.0
      %363 = vmatprep.subr.mxu0 0.0
      %364 = vmatpush2.msra.mxu0 0.0
      %365 = vmatprep.mubr.f32.mxu0 0.0
      %366 = vmatmul.mubr.f32.gmra.mxu0 %v299
      %v367 = vpop.f32.mrf.mxu0
      %v368 = vadd.f32 %v296, %v367
      %v369 = vpop.f32.mrf.mxu0
      %370 = vdwg.mxu0
      %v371 = vadd.f32 %v289, %v368
      %v372 = vxor.u32 %v371, 2147483648
      %v373 = vmul.f32 %v372, 1.442695
      %v374 = vpow.pop %v373
      %v375 = vadd.f32 %v374, 1.0
      %v376 = vrcp.pop %v375
      %v377 = vmul.f32 1.0, %v376
      %379 = vrot.lane.b32.xlu0 %v368, 64
      %v380 = vpop.permute.xlu0 %379
      %v382 = vmul.f32 %v377, %v380
      %384 = vrot.lane.b32.xlu0 %v382, 64
      %v385 = vpop.permute.xlu0 %384
      %v387 = vadd.f32 %v289, %v385
      %v388 = vtanh.pop %v387
      %v389 = vsub.f32 1.0, %v377
      %391 = vrot.lane.b32.xlu0 %v388, 96
      %v392 = vpop.permute.xlu0 %391
      %v394 = vmul.f32 %v389, %v392
      %395 = vrot.lane.b32.xlu0 %v214, 32
      %v396 = vpop.permute.xlu0 %395
      %v398 = vmul.f32 %v377, %v396
      %v399 = vadd.f32 %v394, %v398
      %401 = vrot.lane.b32.xlu0 %v399, 96
      %v402 = vpop.permute.xlu0 %401
      %404 = vst.msk [vmem:[%s5] sm:$0xff] %vm297, %v402
      // Predicated region
      $region45: #{seq2seq_forward.2} parent=39 // pred_check
        %p405 = pneg %p139
      $region46: #{seq2seq_forward.2} parent=39 // pred_check_branch
        %407 = sbr.rel (%p405) target = $region48
      $region47: #{seq2seq_forward.2} parent=39 // pred_region
        _
      $region48: #{seq2seq_forward.2} parent=39 // pred_fallthru
        _
      // Predicated region
      $region49: #{seq2seq_forward.2} parent=39 // pred_check
        %p408 = pneg %p139
      $region50: #{seq2seq_forward.2} parent=39 // pred_check_branch
        %410 = sbr.rel (%p408) target = $region52
      $region51: #{seq2seq_forward.2} parent=39 // pred_region
        _
      $region52: #{seq2seq_forward.2} parent=39 // pred_fallthru
        _
    $region40: #{seq2seq_forward.2} parent=5 // pred_fallthru
      _
    %p411 = scmp.le.s32.totalorder 2, %s11
    // Predicated region
    $region53: #{seq2seq_forward.2} parent=5 // pred_check
      %p412 = pneg %p411
    $region54: #{seq2seq_forward.2} parent=5 // pred_check_branch
      %414 = sbr.rel (%p412) target = $region56
    $region55: #{seq2seq_forward.2} parent=5 // pred_region
      %s415 = ssub.s32 %s11, 2
    $region56: #{seq2seq_forward.2} parent=5 // pred_fallthru
      _
  $region6: #{seq2seq_forward.2} parent=0 // loop_footer
    %s15 = sadd.s32 1, %s11
  $region7: #{seq2seq_forward.2} parent=0 // loop_footer_branch
    %10 = sbr.rel target = $region3
  $region8: #{seq2seq_forward.2} parent=0 // loop_exit
    _

// kernel: seq2seq_forward.3
$region0: #{seq2seq_forward.3}
  #allocation0 [shape = 'u32[]', space=smem, size = 0x4, offset = 0x4, fixed_abs, tag = 'smem constant byte address 0x4 - core index']
  #allocation1 [shape = 'u32[144,128]{1,0:T(1,128)}', space=vmem, size = 0x12000, scoped, tag = 'internal scratch']
  #allocation2 [shape = 'f32[8,32]{1,0:T(8,128)}', space=vmem, size = 0x1000, scoped, tag = 'scratch operand']
  #allocation3 [shape = 'f32[8,128]{1,0:T(8,128)}', space=vmem, size = 0x1000, scoped, tag = 'scratch operand']
  #allocation4 [shape = 'f32[8,96]{1,0:T(8,128)}', space=vmem, size = 0x1000, scoped, tag = 'scratch operand']
  #allocation5 [shape = 'f32[8,128]{1,0:T(8,128)}', space=vmem, size = 0x1000, scoped, tag = 'scratch operand']
  #allocation6 [shape = 's32[1]{0}', space=sflag, size = 0x4, scoped, tag = 'scoped memory for seq2seq_forward.3']
  #allocation7 [shape = 'u8[512]{0}', space=smem, size = 0x200, scoped, tag = 'prefetched SMEM operand 0']
  %s0 = inlined_call_operand.vmem [shape: s32[7], index: 0, kind: input, shape index: {}]
  %s1 = inlined_call_operand.vmem [shape: f32[8,8,128], index: 1, kind: input, shape index: {}]
  %s2 = inlined_call_operand.vmem [shape: f32[8,32], index: 2, kind: input, shape index: {}]
  %s3 = inlined_call_operand.vmem [shape: f32[16,96], index: 3, kind: input, shape index: {}]
  %s4 = inlined_call_operand.vmem [shape: f32[32,96], index: 4, kind: input, shape index: {}]
  %s5 = inlined_call_operand.vmem [shape: f32[32,96], index: 5, kind: input, shape index: {}]
  %s6 = inlined_call_operand.vmem [shape: f32[8,96], index: 6, kind: input, shape index: {}]
  %s7 = inlined_call_operand.vmem [shape: f32[8,96], index: 7, kind: input, shape index: {}]
  %s8 = inlined_call_operand.vmem [shape: f32[128,16], index: 8, kind: input, shape index: {}]
  %s9 = inlined_call_operand.vmem [shape: f32[16,128], index: 9, kind: input, shape index: {}]
  %s10 = inlined_call_operand.vmem [shape: f32[32,128], index: 10, kind: input, shape index: {}]
  %s11 = inlined_call_operand.vmem [shape: f32[32,128], index: 11, kind: input, shape index: {}]
  %s12 = inlined_call_operand.vmem [shape: f32[8,128], index: 12, kind: input, shape index: {}]
  %s13 = inlined_call_operand.vmem [shape: f32[7,8,128], index: 13, kind: output, shape index: {}]
  %s14 = sld [smem:[#allocation0]]
  $region85: #{seq2seq_forward.3} parent=0
    _
  %s16 = ssub.s32 1, %s14
  %s17 = scalar_select 0, %s16, %s14
  %s18 = sshll.u32 %s0, 4
  %s19 = int_to_ptr.vmem [resolvable:$true] %s18
  %21 = dma.vmem_to_smem %s19, 16, [#allocation7], [#allocation6]
  %22 = dma.done [#allocation6], 16
  %23 = sfence
  loop: start=0, step=1, limit=9
  $region2: #{seq2seq_forward.3} parent=0 // loop_pre_header
    _
  $region3: #{seq2seq_forward.3} parent=0 // loop_header
    %s25 = sphi 0, %s29
    %p26 = scmp.ge.s32.totalorder %s25, 9
    %s33 = sphi 0, %s33
    %s35 = sphi 0, %s33
    %s36 = sphi 0, %s35
    %s50 = sphi 0, %s36
    %s54 = sphi 0, %s54
    %s56 = sphi 0, %s54
    %s57 = sphi 0, %s56
    %s71 = sphi 0, %s57
    %s75 = sphi 0, %s75
    %s77 = sphi 0, %s75
    %s78 = sphi 0, %s77
    %s92 = sphi 0, %s78
    %s96 = sphi 0, %s96
    %s98 = sphi 0, %s96
    %s99 = sphi 0, %s98
    %s113 = sphi 0, %s99
    %s117 = sphi 0, %s117
    %s119 = sphi 0, %s117
    %s120 = sphi 0, %s119
    %s134 = sphi 0, %s120
    %s138 = sphi 0, %s138
    %s140 = sphi 0, %s138
    %s141 = sphi 0, %s140
    %s155 = sphi 0, %s141
    %s159 = sphi 0, %s159
    %s161 = sphi 0, %s159
    %s162 = sphi 0, %s161
    %s176 = sphi 0, %s162
    %s180 = sphi 0, %s180
    %s182 = sphi 0, %s180
    %s183 = sphi 0, %s182
    %s197 = sphi 0, %s183
    %s201 = sphi 0, %s201
    %s203 = sphi 0, %s201
    %s204 = sphi 0, %s203
    %s218 = sphi 0, %s204
    %s222 = sphi 0, %s222
    %s224 = sphi 0, %s222
    %s225 = sphi 0, %s224
    %s239 = sphi 0, %s225
    %s243 = sphi 0, %s243
    %s245 = sphi 0, %s243
    %s246 = sphi 0, %s245
    %s260 = sphi 0, %s246
    %s264 = sphi 0, %s264
    %s266 = sphi 0, %s264
    %s267 = sphi 0, %s266
    %s281 = sphi 0, %s267
    %s287 = sphi 0, %s289
    %s290 = sphi 0, %s287
    %s291 = sphi 0, %s290
    %s307 = sphi 0, %s291
  $region4: #{seq2seq_forward.3} parent=0 // loop_header_branch
    %28 = sbr.rel (%p26) target = $region8
  $region5: #{seq2seq_forward.3} parent=0 // loop_body
    %s30 = ssub.s32 %s25, 1
    %s31 = ssub.s32 %s25, 2
    %s32 = sadd.s32 %s25, 1
    %s34 = sadd.s32 %s33, 1
    %p37 = scmp.eq.s32.totalorder %s25, 6
    %p38 = scmp.ne.s32.totalorder %s33, %s35
    %p39 = scmp.eq.s32.totalorder %s25, 0
    %p40 = por %p38, %p39
    %p41 = scmp.ne.s32.totalorder %s33, %s35
    %p42 = scmp.eq.s32.totalorder %s30, 6
    %p43 = por %p41, %p42
    %p44 = scmp.ne.s32.totalorder %s35, %s36
    %p45 = scmp.eq.s32.totalorder %s30, 0
    %p46 = por %p44, %p45
    %p47 = scmp.ne.s32.totalorder %s35, %s36
    %p48 = scmp.eq.s32.totalorder %s31, 6
    %p49 = por %p47, %p48
    %p51 = scmp.ne.s32.totalorder %s36, %s50
    %p52 = scmp.eq.s32.totalorder %s31, 0
    %p53 = por %p51, %p52
    %s55 = sadd.s32 %s54, 1
    %p58 = scmp.eq.s32.totalorder %s25, 6
    %p59 = scmp.ne.s32.totalorder %s54, %s56
    %p60 = scmp.eq.s32.totalorder %s25, 0
    %p61 = por %p59, %p60
    %p62 = scmp.ne.s32.totalorder %s54, %s56
    %p63 = scmp.eq.s32.totalorder %s30, 6
    %p64 = por %p62, %p63
    %p65 = scmp.ne.s32.totalorder %s56, %s57
    %p66 = scmp.eq.s32.totalorder %s30, 0
    %p67 = por %p65, %p66
    %p68 = scmp.ne.s32.totalorder %s56, %s57
    %p69 = scmp.eq.s32.totalorder %s31, 6
    %p70 = por %p68, %p69
    %p72 = scmp.ne.s32.totalorder %s57, %s71
    %p73 = scmp.eq.s32.totalorder %s31, 0
    %p74 = por %p72, %p73
    %s76 = sadd.s32 %s75, 1
    %p79 = scmp.eq.s32.totalorder %s25, 6
    %p80 = scmp.ne.s32.totalorder %s75, %s77
    %p81 = scmp.eq.s32.totalorder %s25, 0
    %p82 = por %p80, %p81
    %p83 = scmp.ne.s32.totalorder %s75, %s77
    %p84 = scmp.eq.s32.totalorder %s30, 6
    %p85 = por %p83, %p84
    %p86 = scmp.ne.s32.totalorder %s77, %s78
    %p87 = scmp.eq.s32.totalorder %s30, 0
    %p88 = por %p86, %p87
    %p89 = scmp.ne.s32.totalorder %s77, %s78
    %p90 = scmp.eq.s32.totalorder %s31, 6
    %p91 = por %p89, %p90
    %p93 = scmp.ne.s32.totalorder %s78, %s92
    %p94 = scmp.eq.s32.totalorder %s31, 0
    %p95 = por %p93, %p94
    %s97 = sadd.s32 %s96, 1
    %p100 = scmp.eq.s32.totalorder %s25, 6
    %p101 = scmp.ne.s32.totalorder %s96, %s98
    %p102 = scmp.eq.s32.totalorder %s25, 0
    %p103 = por %p101, %p102
    %p104 = scmp.ne.s32.totalorder %s96, %s98
    %p105 = scmp.eq.s32.totalorder %s30, 6
    %p106 = por %p104, %p105
    %p107 = scmp.ne.s32.totalorder %s98, %s99
    %p108 = scmp.eq.s32.totalorder %s30, 0
    %p109 = por %p107, %p108
    %p110 = scmp.ne.s32.totalorder %s98, %s99
    %p111 = scmp.eq.s32.totalorder %s31, 6
    %p112 = por %p110, %p111
    %p114 = scmp.ne.s32.totalorder %s99, %s113
    %p115 = scmp.eq.s32.totalorder %s31, 0
    %p116 = por %p114, %p115
    %s118 = sadd.s32 %s117, 1
    %p121 = scmp.eq.s32.totalorder %s25, 6
    %p122 = scmp.ne.s32.totalorder %s117, %s119
    %p123 = scmp.eq.s32.totalorder %s25, 0
    %p124 = por %p122, %p123
    %p125 = scmp.ne.s32.totalorder %s117, %s119
    %p126 = scmp.eq.s32.totalorder %s30, 6
    %p127 = por %p125, %p126
    %p128 = scmp.ne.s32.totalorder %s119, %s120
    %p129 = scmp.eq.s32.totalorder %s30, 0
    %p130 = por %p128, %p129
    %p131 = scmp.ne.s32.totalorder %s119, %s120
    %p132 = scmp.eq.s32.totalorder %s31, 6
    %p133 = por %p131, %p132
    %p135 = scmp.ne.s32.totalorder %s120, %s134
    %p136 = scmp.eq.s32.totalorder %s31, 0
    %p137 = por %p135, %p136
    %s139 = sadd.s32 %s138, 1
    %p142 = scmp.eq.s32.totalorder %s25, 6
    %p143 = scmp.ne.s32.totalorder %s138, %s140
    %p144 = scmp.eq.s32.totalorder %s25, 0
    %p145 = por %p143, %p144
    %p146 = scmp.ne.s32.totalorder %s138, %s140
    %p147 = scmp.eq.s32.totalorder %s30, 6
    %p148 = por %p146, %p147
    %p149 = scmp.ne.s32.totalorder %s140, %s141
    %p150 = scmp.eq.s32.totalorder %s30, 0
    %p151 = por %p149, %p150
    %p152 = scmp.ne.s32.totalorder %s140, %s141
    %p153 = scmp.eq.s32.totalorder %s31, 6
    %p154 = por %p152, %p153
    %p156 = scmp.ne.s32.totalorder %s141, %s155
    %p157 = scmp.eq.s32.totalorder %s31, 0
    %p158 = por %p156, %p157
    %s160 = sadd.s32 %s159, 1
    %p163 = scmp.eq.s32.totalorder %s25, 6
    %p164 = scmp.ne.s32.totalorder %s159, %s161
    %p165 = scmp.eq.s32.totalorder %s25, 0
    %p166 = por %p164, %p165
    %p167 = scmp.ne.s32.totalorder %s159, %s161
    %p168 = scmp.eq.s32.totalorder %s30, 6
    %p169 = por %p167, %p168
    %p170 = scmp.ne.s32.totalorder %s161, %s162
    %p171 = scmp.eq.s32.totalorder %s30, 0
    %p172 = por %p170, %p171
    %p173 = scmp.ne.s32.totalorder %s161, %s162
    %p174 = scmp.eq.s32.totalorder %s31, 6
    %p175 = por %p173, %p174
    %p177 = scmp.ne.s32.totalorder %s162, %s176
    %p178 = scmp.eq.s32.totalorder %s31, 0
    %p179 = por %p177, %p178
    %s181 = sadd.s32 %s180, 1
    %p184 = scmp.eq.s32.totalorder %s25, 6
    %p185 = scmp.ne.s32.totalorder %s180, %s182
    %p186 = scmp.eq.s32.totalorder %s25, 0
    %p187 = por %p185, %p186
    %p188 = scmp.ne.s32.totalorder %s180, %s182
    %p189 = scmp.eq.s32.totalorder %s30, 6
    %p190 = por %p188, %p189
    %p191 = scmp.ne.s32.totalorder %s182, %s183
    %p192 = scmp.eq.s32.totalorder %s30, 0
    %p193 = por %p191, %p192
    %p194 = scmp.ne.s32.totalorder %s182, %s183
    %p195 = scmp.eq.s32.totalorder %s31, 6
    %p196 = por %p194, %p195
    %p198 = scmp.ne.s32.totalorder %s183, %s197
    %p199 = scmp.eq.s32.totalorder %s31, 0
    %p200 = por %p198, %p199
    %s202 = sadd.s32 %s201, 1
    %p205 = scmp.eq.s32.totalorder %s25, 6
    %p206 = scmp.ne.s32.totalorder %s201, %s203
    %p207 = scmp.eq.s32.totalorder %s25, 0
    %p208 = por %p206, %p207
    %p209 = scmp.ne.s32.totalorder %s201, %s203
    %p210 = scmp.eq.s32.totalorder %s30, 6
    %p211 = por %p209, %p210
    %p212 = scmp.ne.s32.totalorder %s203, %s204
    %p213 = scmp.eq.s32.totalorder %s30, 0
    %p214 = por %p212, %p213
    %p215 = scmp.ne.s32.totalorder %s203, %s204
    %p216 = scmp.eq.s32.totalorder %s31, 6
    %p217 = por %p215, %p216
    %p219 = scmp.ne.s32.totalorder %s204, %s218
    %p220 = scmp.eq.s32.totalorder %s31, 0
    %p221 = por %p219, %p220
    %s223 = sadd.s32 %s222, 1
    %p226 = scmp.eq.s32.totalorder %s25, 6
    %p227 = scmp.ne.s32.totalorder %s222, %s224
    %p228 = scmp.eq.s32.totalorder %s25, 0
    %p229 = por %p227, %p228
    %p230 = scmp.ne.s32.totalorder %s222, %s224
    %p231 = scmp.eq.s32.totalorder %s30, 6
    %p232 = por %p230, %p231
    %p233 = scmp.ne.s32.totalorder %s224, %s225
    %p234 = scmp.eq.s32.totalorder %s30, 0
    %p235 = por %p233, %p234
    %p236 = scmp.ne.s32.totalorder %s224, %s225
    %p237 = scmp.eq.s32.totalorder %s31, 6
    %p238 = por %p236, %p237
    %p240 = scmp.ne.s32.totalorder %s225, %s239
    %p241 = scmp.eq.s32.totalorder %s31, 0
    %p242 = por %p240, %p241
    %s244 = sadd.s32 %s243, 1
    %p247 = scmp.eq.s32.totalorder %s25, 6
    %p248 = scmp.ne.s32.totalorder %s243, %s245
    %p249 = scmp.eq.s32.totalorder %s25, 0
    %p250 = por %p248, %p249
    %p251 = scmp.ne.s32.totalorder %s243, %s245
    %p252 = scmp.eq.s32.totalorder %s30, 6
    %p253 = por %p251, %p252
    %p254 = scmp.ne.s32.totalorder %s245, %s246
    %p255 = scmp.eq.s32.totalorder %s30, 0
    %p256 = por %p254, %p255
    %p257 = scmp.ne.s32.totalorder %s245, %s246
    %p258 = scmp.eq.s32.totalorder %s31, 6
    %p259 = por %p257, %p258
    %p261 = scmp.ne.s32.totalorder %s246, %s260
    %p262 = scmp.eq.s32.totalorder %s31, 0
    %p263 = por %p261, %p262
    %s265 = sadd.s32 %s264, 1
    %p268 = scmp.eq.s32.totalorder %s25, 6
    %p269 = scmp.ne.s32.totalorder %s264, %s266
    %p270 = scmp.eq.s32.totalorder %s25, 0
    %p271 = por %p269, %p270
    %p272 = scmp.ne.s32.totalorder %s264, %s266
    %p273 = scmp.eq.s32.totalorder %s30, 6
    %p274 = por %p272, %p273
    %p275 = scmp.ne.s32.totalorder %s266, %s267
    %p276 = scmp.eq.s32.totalorder %s30, 0
    %p277 = por %p275, %p276
    %p278 = scmp.ne.s32.totalorder %s266, %s267
    %p279 = scmp.eq.s32.totalorder %s31, 6
    %p280 = por %p278, %p279
    %p282 = scmp.ne.s32.totalorder %s267, %s281
    %p283 = scmp.eq.s32.totalorder %s31, 0
    %p284 = por %p282, %p283
    %s285 = ssub.s32 %s25, %s32
    %p286 = scmp.eq.s32.totalorder %s285, 0
    %s288 = sadd.s32 %s287, 1
    %s289 = scalar_select %p286, %s287, %s288
    %p292 = pneg %p286
    %p293 = scmp.eq.s32.totalorder %s25, 6
    %p294 = por %p292, %p293
    %p295 = scmp.ne.s32.totalorder %s287, %s290
    %p296 = scmp.eq.s32.totalorder %s25, 0
    %p297 = por %p295, %p296
    %p298 = scmp.ne.s32.totalorder %s287, %s290
    %p299 = scmp.eq.s32.totalorder %s30, 6
    %p300 = por %p298, %p299
    %p301 = scmp.ne.s32.totalorder %s290, %s291
    %p302 = scmp.eq.s32.totalorder %s30, 0
    %p303 = por %p301, %p302
    %p304 = scmp.ne.s32.totalorder %s290, %s291
    %p305 = scmp.eq.s32.totalorder %s31, 6
    %p306 = por %p304, %p305
    %p308 = scmp.ne.s32.totalorder %s291, %s307
    %p309 = scmp.eq.s32.totalorder %s31, 0
    %p310 = por %p308, %p309
    %p311 = scmp.le.s32.totalorder 1, %s25
    %p312 = scmp.lt.s32.totalorder %s25, 8
    %p313 = pnand %p311, %p312
    %p314 = pneg %p313
    // Predicated region
    $region9: #{seq2seq_forward.3} parent=5 // pred_check
      _
    $region10: #{seq2seq_forward.3} parent=5 // pred_check_branch
      %316 = sbr.rel (%p313) target = $region12
    $region11: #{seq2seq_forward.3} parent=5 // pred_region
      %s317 = ssub.s32 %s25, 1
      // Predicated region
      $region13: #{seq2seq_forward.3} parent=11 // pred_check
        %p318 = pneg %p46
      $region14: #{seq2seq_forward.3} parent=11 // pred_check_branch
        %320 = sbr.rel (%p318) target = $region16
      $region15: #{seq2seq_forward.3} parent=11 // pred_region
        _
      $region16: #{seq2seq_forward.3} parent=11 // pred_fallthru
        _
      // Predicated region
      $region17: #{seq2seq_forward.3} parent=11 // pred_check
        %p321 = pneg %p67
      $region18: #{seq2seq_forward.3} parent=11 // pred_check_branch
        %323 = sbr.rel (%p321) target = $region20
      $region19: #{seq2seq_forward.3} parent=11 // pred_region
        _
      $region20: #{seq2seq_forward.3} parent=11 // pred_fallthru
        _
      // Predicated region
      $region21: #{seq2seq_forward.3} parent=11 // pred_check
        %p324 = pneg %p88
      $region22: #{seq2seq_forward.3} parent=11 // pred_check_branch
        %326 = sbr.rel (%p324) target = $region24
      $region23: #{seq2seq_forward.3} parent=11 // pred_region
        _
      $region24: #{seq2seq_forward.3} parent=11 // pred_fallthru
        _
      // Predicated region
      $region25: #{seq2seq_forward.3} parent=11 // pred_check
        %p327 = pneg %p109
      $region26: #{seq2seq_forward.3} parent=11 // pred_check_branch
        %329 = sbr.rel (%p327) target = $region28
      $region27: #{seq2seq_forward.3} parent=11 // pred_region
        _
      $region28: #{seq2seq_forward.3} parent=11 // pred_fallthru
        _
      // Predicated region
      $region29: #{seq2seq_forward.3} parent=11 // pred_check
        %p330 = pneg %p130
      $region30: #{seq2seq_forward.3} parent=11 // pred_check_branch
        %332 = sbr.rel (%p330) target = $region32
      $region31: #{seq2seq_forward.3} parent=11 // pred_region
        _
      $region32: #{seq2seq_forward.3} parent=11 // pred_fallthru
        _
      // Predicated region
      $region33: #{seq2seq_forward.3} parent=11 // pred_check
        %p333 = pneg %p151
      $region34: #{seq2seq_forward.3} parent=11 // pred_check_branch
        %335 = sbr.rel (%p333) target = $region36
      $region35: #{seq2seq_forward.3} parent=11 // pred_region
        _
      $region36: #{seq2seq_forward.3} parent=11 // pred_fallthru
        _
      // Predicated region
      $region37: #{seq2seq_forward.3} parent=11 // pred_check
        %p336 = pneg %p172
      $region38: #{seq2seq_forward.3} parent=11 // pred_check_branch
        %338 = sbr.rel (%p336) target = $region40
      $region39: #{seq2seq_forward.3} parent=11 // pred_region
        _
      $region40: #{seq2seq_forward.3} parent=11 // pred_fallthru
        _
      // Predicated region
      $region41: #{seq2seq_forward.3} parent=11 // pred_check
        %p339 = pneg %p193
      $region42: #{seq2seq_forward.3} parent=11 // pred_check_branch
        %341 = sbr.rel (%p339) target = $region44
      $region43: #{seq2seq_forward.3} parent=11 // pred_region
        _
      $region44: #{seq2seq_forward.3} parent=11 // pred_fallthru
        _
      // Predicated region
      $region45: #{seq2seq_forward.3} parent=11 // pred_check
        %p342 = pneg %p214
      $region46: #{seq2seq_forward.3} parent=11 // pred_check_branch
        %344 = sbr.rel (%p342) target = $region48
      $region47: #{seq2seq_forward.3} parent=11 // pred_region
        _
      $region48: #{seq2seq_forward.3} parent=11 // pred_fallthru
        _
      // Predicated region
      $region49: #{seq2seq_forward.3} parent=11 // pred_check
        %p345 = pneg %p235
      $region50: #{seq2seq_forward.3} parent=11 // pred_check_branch
        %347 = sbr.rel (%p345) target = $region52
      $region51: #{seq2seq_forward.3} parent=11 // pred_region
        _
      $region52: #{seq2seq_forward.3} parent=11 // pred_fallthru
        _
      // Predicated region
      $region53: #{seq2seq_forward.3} parent=11 // pred_check
        %p348 = pneg %p256
      $region54: #{seq2seq_forward.3} parent=11 // pred_check_branch
        %350 = sbr.rel (%p348) target = $region56
      $region55: #{seq2seq_forward.3} parent=11 // pred_region
        _
      $region56: #{seq2seq_forward.3} parent=11 // pred_fallthru
        _
      // Predicated region
      $region57: #{seq2seq_forward.3} parent=11 // pred_check
        %p351 = pneg %p277
      $region58: #{seq2seq_forward.3} parent=11 // pred_check_branch
        %353 = sbr.rel (%p351) target = $region60
      $region59: #{seq2seq_forward.3} parent=11 // pred_region
        _
      $region60: #{seq2seq_forward.3} parent=11 // pred_fallthru
        _
    $region12: #{seq2seq_forward.3} parent=5 // pred_fallthru
      _
    %p354 = scmp.lt.s32.totalorder %s25, 7
    // Predicated region
    $region61: #{seq2seq_forward.3} parent=5 // pred_check
      %p355 = pneg %p354
    $region62: #{seq2seq_forward.3} parent=5 // pred_check_branch
      %357 = sbr.rel (%p355) target = $region64
    $region63: #{seq2seq_forward.3} parent=5 // pred_region
      _
    $region64: #{seq2seq_forward.3} parent=5 // pred_fallthru
      _
    %p358 = scmp.le.s32.totalorder 1, %s25
    %p359 = scmp.lt.s32.totalorder %s25, 8
    %p360 = pnand %p358, %p359
    %p361 = pneg %p360
    // Predicated region
    $region65: #{seq2seq_forward.3} parent=5 // pred_check
      _
    $region66: #{seq2seq_forward.3} parent=5 // pred_check_branch
      %363 = sbr.rel (%p360) target = $region68
    $region67: #{seq2seq_forward.3} parent=5 // pred_region
      %s364 = ssub.s32 %s25, 1
      %p365 = pneg %p46
      %p366 = pneg %p43
      %p367 = pneg %p67
      %p368 = pneg %p64
      %p369 = pneg %p88
      %p370 = pneg %p85
      %p371 = pneg %p109
      %p372 = pneg %p106
      %p373 = pneg %p130
      %p374 = pneg %p127
      %p375 = pneg %p151
      %p376 = pneg %p148
      %p377 = pneg %p172
      %p378 = pneg %p169
      %p379 = pneg %p193
      %p380 = pneg %p190
      %p381 = pneg %p214
      %p382 = pneg %p211
      %p383 = pneg %p235
      %p384 = pneg %p232
      %p385 = pneg %p256
      %p386 = pneg %p253
      %p387 = pneg %p277
      %p388 = pneg %p274
      %p389 = pneg %p303
      %p390 = pneg %p300
      %p391 = scmp.lt.s32.totalorder %s30, 6
      %s392 = scalar_select %p391, %s30, 6
      %s393 = smul.addr %s392, 8
      %s394 = scalar_lea.vmem %s13, %s393
      %p395 = scmp.lt.s32.totalorder %s30, 6
      %s396 = scalar_select %p395, %s30, 6
      %s397 = smul.addr %s396, 8
      %s398 = scalar_lea.vmem %s13, %s397
      %p399 = scmp.eq.s32.totalorder %s30, 0
      // Predicated region
      $region69: #{seq2seq_forward.3} parent=67 // pred_check
        %p400 = pneg %p399
      $region70: #{seq2seq_forward.3} parent=67 // pred_check_branch
        %402 = sbr.rel (%p400) target = $region72
      $region71: #{seq2seq_forward.3} parent=67 // pred_region
        %v403 = vld [vmem:[%s2] sm:$0xff]
        %vm404 = vcmask 261120
        %405 = vst.msk [vmem:[#allocation2] sm:$0xff] %vm404, %v403
        %v406 = vld [vmem:[%s1] sm:$0xff]
        %407 = vst [vmem:[#allocation3] sm:$0xff] %v406
        %v408 = vld [vmem:[%s4] sm:$0xff]
        %v409 = vld [vmem:[%s4 + $0x8] sm:$0xff]
        %v410 = vld [vmem:[%s4 + $0x10] sm:$0xff]
        %v411 = vld [vmem:[%s4 + $0x18] sm:$0xff]
        %v412 = vld [vmem:[%s6] sm:$0xff]
        %v414 = vsel %vm404, %v403, 0
        %416 = vmatprep.subr.mxu0 0.0
        %417 = vmatpush1.msra.mxu0 0.0
        %418 = vmatprep.subr.mxu0 0.0
        %419 = vmatpush1.msra.mxu0 0.0
        %420 = vmatprep.subr.mxu0 0.0
        %421 = vmatpush1.msra.mxu0 0.0
        %422 = vmatprep.subr.mxu0 0.0
        %423 = vmatpush1.msra.mxu0 0.0
        %424 = vmatprep.subr.mxu0 0.0
        %425 = vmatpush1.msra.mxu0 0.0
        %426 = vmatprep.subr.mxu0 0.0
        %427 = vmatpush1.msra.mxu0 0.0
        %428 = vmatprep.subr.mxu0 0.0
        %429 = vmatpush1.msra.mxu0 0.0
        %430 = vmatprep.subr.mxu0 0.0
        %431 = vmatpush1.msra.mxu0 0.0
        %432 = vmatprep.subr.mxu0 0.0
        %433 = vmatpush1.msra.mxu0 0.0
        %434 = vmatprep.subr.mxu0 0.0
        %435 = vmatpush1.msra.mxu0 0.0
        %436 = vmatprep.subr.mxu0 0.0
        %437 = vmatpush1.msra.mxu0 0.0
        %438 = vmatprep.subr.mxu0 0.0
        %439 = vmatpush1.msra.mxu0 0.0
        %440 = vmatprep.subr.mxu0 0.0
        %441 = vmatpush1.msra.mxu0 %v411
        %442 = vmatprep.subr.mxu0 0.0
        %443 = vmatpush1.msra.mxu0 %v410
        %444 = vmatprep.subr.mxu0 0.0
        %445 = vmatpush1.msra.mxu0 %v409
        %446 = vmatprep.subr.mxu0 0.0
        %447 = vmatpush1.msra.mxu0 %v408
        %448 = vmatprep.subr.mxu0 0.0
        %449 = vmatpush2.msra.mxu0 0.0
        %450 = vmatprep.subr.mxu0 0.0
        %451 = vmatpush2.msra.mxu0 0.0
        %452 = vmatprep.subr.mxu0 0.0
        %453 = vmatpush2.msra.mxu0 0.0
        %454 = vmatprep.subr.mxu0 0.0
        %455 = vmatpush2.msra.mxu0 0.0
        %456 = vmatprep.subr.mxu0 0.0
        %457 = vmatpush2.msra.mxu0 0.0
        %458 = vmatprep.subr.mxu0 0.0
        %459 = vmatpush2.msra.mxu0 0.0
        %460 = vmatprep.subr.mxu0 0.0
        %461 = vmatpush2.msra.mxu0 0.0
        %462 = vmatprep.subr.mxu0 0.0
        %463 = vmatpush2.msra.mxu0 0.0
        %464 = vmatprep.subr.mxu0 0.0
        %465 = vmatpush2.msra.mxu0 0.0
        %466 = vmatprep.subr.mxu0 0.0
        %467 = vmatpush2.msra.mxu0 0.0
        %468 = vmatprep.subr.mxu0 0.0
        %469 = vmatpush2.msra.mxu0 0.0
        %470 = vmatprep.subr.mxu0 0.0
        %471 = vmatpush2.msra.mxu0 0.0
        %472 = vmatprep.subr.mxu0 0.0
        %473 = vmatpush2.msra.mxu0 0.0
        %474 = vmatprep.subr.mxu0 0.0
        %475 = vmatpush2.msra.mxu0 0.0
        %476 = vmatprep.subr.mxu0 0.0
        %477 = vmatpush2.msra.mxu0 0.0
        %478 = vmatprep.subr.mxu0 0.0
        %479 = vmatpush2.msra.mxu0 0.0
        %480 = vmatprep.mubr.f32.mxu0 0.0
        %481 = vmatmul.mubr.f32.gmra.mxu0 %v414
        %v482 = vpop.f32.mrf.mxu0
        %v483 = vadd.f32 %v412, %v482
        %v484 = vpop.f32.mrf.mxu0
        %485 = vdwg.mxu0
        %vm486 = vcmask 785408
        %487 = vst.msk [vmem:[#allocation4] sm:$0xff] %vm486, %v483
        %v488 = vld [vmem:[%s11] sm:$0xff]
        %v489 = vld [vmem:[%s11 + $0x8] sm:$0xff]
        %v490 = vld [vmem:[%s11 + $0x10] sm:$0xff]
        %v491 = vld [vmem:[%s11 + $0x18] sm:$0xff]
        %v492 = vld [vmem:[%s12] sm:$0xff]
        %493 = vmatprep.subr.mxu0 0.0
        %494 = vmatpush1.msra.mxu0 0.0
        %495 = vmatprep.subr.mxu0 0.0
        %496 = vmatpush1.msra.mxu0 0.0
        %497 = vmatprep.subr.mxu0 0.0
        %498 = vmatpush1.msra.mxu0 0.0
        %499 = vmatprep.subr.mxu0 0.0
        %500 = vmatpush1.msra.mxu0 0.0
        %501 = vmatprep.subr.mxu0 0.0
        %502 = vmatpush1.msra.mxu0 0.0
        %503 = vmatprep.subr.mxu0 0.0
        %504 = vmatpush1.msra.mxu0 0.0
        %505 = vmatprep.subr.mxu0 0.0
        %506 = vmatpush1.msra.mxu0 0.0
        %507 = vmatprep.subr.mxu0 0.0
        %508 = vmatpush1.msra.mxu0 0.0
        %509 = vmatprep.subr.mxu0 0.0
        %510 = vmatpush1.msra.mxu0 0.0
        %511 = vmatprep.subr.mxu0 0.0
        %512 = vmatpush1.msra.mxu0 0.0
        %513 = vmatprep.subr.mxu0 0.0
        %514 = vmatpush1.msra.mxu0 0.0
        %515 = vmatprep.subr.mxu0 0.0
        %516 = vmatpush1.msra.mxu0 0.0
        %517 = vmatprep.subr.mxu0 0.0
        %518 = vmatpush1.msra.mxu0 %v491
        %519 = vmatprep.subr.mxu0 0.0
        %520 = vmatpush1.msra.mxu0 %v490
        %521 = vmatprep.subr.mxu0 0.0
        %522 = vmatpush1.msra.mxu0 %v489
        %523 = vmatprep.subr.mxu0 0.0
        %524 = vmatpush1.msra.mxu0 %v488
        %525 = vmatprep.subr.mxu0 0.0
        %526 = vmatpush2.msra.mxu0 0.0
        %527 = vmatprep.subr.mxu0 0.0
        %528 = vmatpush2.msra.mxu0 0.0
        %529 = vmatprep.subr.mxu0 0.0
        %530 = vmatpush2.msra.mxu0 0.0
        %531 = vmatprep.subr.mxu0 0.0
        %532 = vmatpush2.msra.mxu0 0.0
        %533 = vmatprep.subr.mxu0 0.0
        %534 = vmatpush2.msra.mxu0 0.0
        %535 = vmatprep.subr.mxu0 0.0
        %536 = vmatpush2.msra.mxu0 0.0
        %537 = vmatprep.subr.mxu0 0.0
        %538 = vmatpush2.msra.mxu0 0.0
        %539 = vmatprep.subr.mxu0 0.0
        %540 = vmatpush2.msra.mxu0 0.0
        %541 = vmatprep.subr.mxu0 0.0
        %542 = vmatpush2.msra.mxu0 0.0
        %543 = vmatprep.subr.mxu0 0.0
        %544 = vmatpush2.msra.mxu0 0.0
        %545 = vmatprep.subr.mxu0 0.0
        %546 = vmatpush2.msra.mxu0 0.0
        %547 = vmatprep.subr.mxu0 0.0
        %548 = vmatpush2.msra.mxu0 0.0
        %549 = vmatprep.subr.mxu0 0.0
        %550 = vmatpush2.msra.mxu0 0.0
        %551 = vmatprep.subr.mxu0 0.0
        %552 = vmatpush2.msra.mxu0 0.0
        %553 = vmatprep.subr.mxu0 0.0
        %554 = vmatpush2.msra.mxu0 0.0
        %555 = vmatprep.subr.mxu0 0.0
        %556 = vmatpush2.msra.mxu0 0.0
        %557 = vmatprep.mubr.f32.mxu0 0.0
        %558 = vmatmul.mubr.f32.gmra.mxu0 %v414
        %v559 = vpop.f32.mrf.mxu0
        %v560 = vadd.f32 %v492, %v559
        %v561 = vpop.f32.mrf.mxu0
        %562 = vdwg.mxu0
        %563 = vst [vmem:[#allocation5] sm:$0xff] %v560
      $region72: #{seq2seq_forward.3} parent=67 // pred_fallthru
        _
      %v564 = vld [vmem:[#allocation3] sm:$0xff]
      %v565 = vld [vmem:[#allocation2] sm:$0xff]
      %v566 = vld [vmem:[%s8] sm:$0xff]
      %v567 = vld [vmem:[%s8 + $0x8] sm:$0xff]
      %v568 = vld [vmem:[%s8 + $0x10] sm:$0xff]
      %v569 = vld [vmem:[%s8 + $0x18] sm:$0xff]
      %v570 = vld [vmem:[%s8 + $0x20] sm:$0xff]
      %v571 = vld [vmem:[%s8 + $0x28] sm:$0xff]
      %v572 = vld [vmem:[%s8 + $0x30] sm:$0xff]
      %v573 = vld [vmem:[%s8 + $0x38] sm:$0xff]
      %v574 = vld [vmem:[%s8 + $0x40] sm:$0xff]
      %v575 = vld [vmem:[%s8 + $0x48] sm:$0xff]
      %v576 = vld [vmem:[%s8 + $0x50] sm:$0xff]
      %v577 = vld [vmem:[%s8 + $0x58] sm:$0xff]
      %v578 = vld [vmem:[%s8 + $0x60] sm:$0xff]
      %v579 = vld [vmem:[%s8 + $0x68] sm:$0xff]
      %v580 = vld [vmem:[%s8 + $0x70] sm:$0xff]
      %v581 = vld [vmem:[%s8 + $0x78] sm:$0xff]
      %582 = vmatprep.subr.mxu0 0.0
      %583 = vmatpush1.msra.mxu0 %v581
      %584 = vmatprep.subr.mxu0 0.0
      %585 = vmatpush1.msra.mxu0 %v580
      %586 = vmatprep.subr.mxu0 0.0
      %587 = vmatpush1.msra.mxu0 %v579
      %588 = vmatprep.subr.mxu0 0.0
      %589 = vmatpush1.msra.mxu0 %v578
      %590 = vmatprep.subr.mxu0 0.0
      %591 = vmatpush1.msra.mxu0 %v577
      %592 = vmatprep.subr.mxu0 0.0
      %593 = vmatpush1.msra.mxu0 %v576
      %594 = vmatprep.subr.mxu0 0.0
      %595 = vmatpush1.msra.mxu0 %v575
      %596 = vmatprep.subr.mxu0 0.0
      %597 = vmatpush1.msra.mxu0 %v574
      %598 = vmatprep.subr.mxu0 0.0
      %599 = vmatpush1.msra.mxu0 %v573
      %600 = vmatprep.subr.mxu0 0.0
      %601 = vmatpush1.msra.mxu0 %v572
      %602 = vmatprep.subr.mxu0 0.0
      %603 = vmatpush1.msra.mxu0 %v571
      %604 = vmatprep.subr.mxu0 0.0
      %605 = vmatpush1.msra.mxu0 %v570
      %606 = vmatprep.subr.mxu0 0.0
      %607 = vmatpush1.msra.mxu0 %v569
      %608 = vmatprep.subr.mxu0 0.0
      %609 = vmatpush1.msra.mxu0 %v568
      %610 = vmatprep.subr.mxu0 0.0
      %611 = vmatpush1.msra.mxu0 %v567
      %612 = vmatprep.subr.mxu0 0.0
      %613 = vmatpush1.msra.mxu0 %v566
      %614 = vmatprep.subr.mxu0 0.0
      %615 = vmatpush2.msra.mxu0 0.0
      %616 = vmatprep.subr.mxu0 0.0
      %617 = vmatpush2.msra.mxu0 0.0
      %618 = vmatprep.subr.mxu0 0.0
      %619 = vmatpush2.msra.mxu0 0.0
      %620 = vmatprep.subr.mxu0 0.0
      %621 = vmatpush2.msra.mxu0 0.0
      %622 = vmatprep.subr.mxu0 0.0
      %623 = vmatpush2.msra.mxu0 0.0
      %624 = vmatprep.subr.mxu0 0.0
      %625 = vmatpush2.msra.mxu0 0.0
      %626 = vmatprep.subr.mxu0 0.0
      %627 = vmatpush2.msra.mxu0 0.0
      %628 = vmatprep.subr.mxu0 0.0
      %629 = vmatpush2.msra.mxu0 0.0
      %630 = vmatprep.subr.mxu0 0.0
      %631 = vmatpush2.msra.mxu0 0.0
      %632 = vmatprep.subr.mxu0 0.0
      %633 = vmatpush2.msra.mxu0 0.0
      %634 = vmatprep.subr.mxu0 0.0
      %635 = vmatpush2.msra.mxu0 0.0
      %636 = vmatprep.subr.mxu0 0.0
      %637 = vmatpush2.msra.mxu0 0.0
      %638 = vmatprep.subr.mxu0 0.0
      %639 = vmatpush2.msra.mxu0 0.0
      %640 = vmatprep.subr.mxu0 0.0
      %641 = vmatpush2.msra.mxu0 0.0
      %642 = vmatprep.subr.mxu0 0.0
      %643 = vmatpush2.msra.mxu0 0.0
      %644 = vmatprep.subr.mxu0 0.0
      %645 = vmatpush2.msra.mxu0 0.0
      %646 = vmatprep.mubr.f32.mxu0 0.0
      %647 = vmatmul.mubr.f32.gmra.mxu0 %v564
      %v648 = vpop.f32.mrf.mxu0
      %v649 = vadd.f32 0.0, %v648
      %v650 = vpop.f32.mrf.mxu0
      %651 = vdwg.mxu0
      %v652 = vld [vmem:[%s3] sm:$0xff]
      %v653 = vld [vmem:[%s3 + $0x8] sm:$0xff]
      %v654 = vld [vmem:[#allocation4] sm:$0xff]
      %vm655 = vcmask 130048
      %v657 = vsel %vm655, %v649, 0
      %659 = vmatprep.subr.mxu0 0.0
      %660 = vmatpush1.msra.mxu0 0.0
      %661 = vmatprep.subr.mxu0 0.0
      %662 = vmatpush1.msra.mxu0 0.0
      %663 = vmatprep.subr.mxu0 0.0
      %664 = vmatpush1.msra.mxu0 0.0
      %665 = vmatprep.subr.mxu0 0.0
      %666 = vmatpush1.msra.mxu0 0.0
      %667 = vmatprep.subr.mxu0 0.0
      %668 = vmatpush1.msra.mxu0 0.0
      %669 = vmatprep.subr.mxu0 0.0
      %670 = vmatpush1.msra.mxu0 0.0
      %671 = vmatprep.subr.mxu0 0.0
      %672 = vmatpush1.msra.mxu0 0.0
      %673 = vmatprep.subr.mxu0 0.0
      %674 = vmatpush1.msra.mxu0 0.0
      %675 = vmatprep.subr.mxu0 0.0
      %676 = vmatpush1.msra.mxu0 0.0
      %677 = vmatprep.subr.mxu0 0.0
      %678 = vmatpush1.msra.mxu0 0.0
      %679 = vmatprep.subr.mxu0 0.0
      %680 = vmatpush1.msra.mxu0 0.0
      %681 = vmatprep.subr.mxu0 0.0
      %682 = vmatpush1.msra.mxu0 0.0
      %683 = vmatprep.subr.mxu0 0.0
      %684 = vmatpush1.msra.mxu0 0.0
      %685 = vmatprep.subr.mxu0 0.0
      %686 = vmatpush1.msra.mxu0 0.0
      %687 = vmatprep.subr.mxu0 0.0
      %688 = vmatpush1.msra.mxu0 %v653
      %689 = vmatprep.subr.mxu0 0.0
      %690 = vmatpush1.msra.mxu0 %v652
      %691 = vmatprep.subr.mxu0 0.0
      %692 = vmatpush2.msra.mxu0 0.0
      %693 = vmatprep.subr.mxu0 0.0
      %694 = vmatpush2.msra.mxu0 0.0
      %695 = vmatprep.subr.mxu0 0.0
      %696 = vmatpush2.msra.mxu0 0.0
      %697 = vmatprep.subr.mxu0 0.0
      %698 = vmatpush2.msra.mxu0 0.0
      %699 = vmatprep.subr.mxu0 0.0
      %700 = vmatpush2.msra.mxu0 0.0
      %701 = vmatprep.subr.mxu0 0.0
      %702 = vmatpush2.msra.mxu0 0.0
      %703 = vmatprep.subr.mxu0 0.0
      %704 = vmatpush2.msra.mxu0 0.0
      %705 = vmatprep.subr.mxu0 0.0
      %706 = vmatpush2.msra.mxu0 0.0
      %707 = vmatprep.subr.mxu0 0.0
      %708 = vmatpush2.msra.mxu0 0.0
      %709 = vmatprep.subr.mxu0 0.0
      %710 = vmatpush2.msra.mxu0 0.0
      %711 = vmatprep.subr.mxu0 0.0
      %712 = vmatpush2.msra.mxu0 0.0
      %713 = vmatprep.subr.mxu0 0.0
      %714 = vmatpush2.msra.mxu0 0.0
      %715 = vmatprep.subr.mxu0 0.0
      %716 = vmatpush2.msra.mxu0 0.0
      %717 = vmatprep.subr.mxu0 0.0
      %718 = vmatpush2.msra.mxu0 0.0
      %719 = vmatprep.subr.mxu0 0.0
      %720 = vmatpush2.msra.mxu0 0.0
      %721 = vmatprep.subr.mxu0 0.0
      %722 = vmatpush2.msra.mxu0 0.0
      %723 = vmatprep.mubr.f32.mxu0 0.0
      %724 = vmatmul.mubr.f32.gmra.mxu0 %v657
      %v725 = vpop.f32.mrf.mxu0
      %v726 = vadd.f32 %v654, %v725
      %v727 = vpop.f32.mrf.mxu0
      %728 = vdwg.mxu0
      %v729 = vld [vmem:[%s5] sm:$0xff]
      %v730 = vld [vmem:[%s5 + $0x8] sm:$0xff]
      %v731 = vld [vmem:[%s5 + $0x10] sm:$0xff]
      %v732 = vld [vmem:[%s5 + $0x18] sm:$0xff]
      %v733 = vld [vmem:[%s7] sm:$0xff]
      %vm734 = vcmask 261120
      %v736 = vsel %vm734, %v565, 0
      %738 = vmatprep.subr.mxu0 0.0
      %739 = vmatpush1.msra.mxu0 0.0
      %740 = vmatprep.subr.mxu0 0.0
      %741 = vmatpush1.msra.mxu0 0.0
      %742 = vmatprep.subr.mxu0 0.0
      %743 = vmatpush1.msra.mxu0 0.0
      %744 = vmatprep.subr.mxu0 0.0
      %745 = vmatpush1.msra.mxu0 0.0
      %746 = vmatprep.subr.mxu0 0.0
      %747 = vmatpush1.msra.mxu0 0.0
      %748 = vmatprep.subr.mxu0 0.0
      %749 = vmatpush1.msra.mxu0 0.0
      %750 = vmatprep.subr.mxu0 0.0
      %751 = vmatpush1.msra.mxu0 0.0
      %752 = vmatprep.subr.mxu0 0.0
      %753 = vmatpush1.msra.mxu0 0.0
      %754 = vmatprep.subr.mxu0 0.0
      %755 = vmatpush1.msra.mxu0 0.0
      %756 = vmatprep.subr.mxu0 0.0
      %757 = vmatpush1.msra.mxu0 0.0
      %758 = vmatprep.subr.mxu0 0.0
      %759 = vmatpush1.msra.mxu0 0.0
      %760 = vmatprep.subr.mxu0 0.0
      %761 = vmatpush1.msra.mxu0 0.0
      %762 = vmatprep.subr.mxu0 0.0
      %763 = vmatpush1.msra.mxu0 %v732
      %764 = vmatprep.subr.mxu0 0.0
      %765 = vmatpush1.msra.mxu0 %v731
      %766 = vmatprep.subr.mxu0 0.0
      %767 = vmatpush1.msra.mxu0 %v730
      %768 = vmatprep.subr.mxu0 0.0
      %769 = vmatpush1.msra.mxu0 %v729
      %770 = vmatprep.subr.mxu0 0.0
      %771 = vmatpush2.msra.mxu0 0.0
      %772 = vmatprep.subr.mxu0 0.0
      %773 = vmatpush2.msra.mxu0 0.0
      %774 = vmatprep.subr.mxu0 0.0
      %775 = vmatpush2.msra.mxu0 0.0
      %776 = vmatprep.subr.mxu0 0.0
      %777 = vmatpush2.msra.mxu0 0.0
      %778 = vmatprep.subr.mxu0 0.0
      %779 = vmatpush2.msra.mxu0 0.0
      %780 = vmatprep.subr.mxu0 0.0
      %781 = vmatpush2.msra.mxu0 0.0
      %782 = vmatprep.subr.mxu0 0.0
      %783 = vmatpush2.msra.mxu0 0.0
      %784 = vmatprep.subr.mxu0 0.0
      %785 = vmatpush2.msra.mxu0 0.0
      %786 = vmatprep.subr.mxu0 0.0
      %787 = vmatpush2.msra.mxu0 0.0
      %788 = vmatprep.subr.mxu0 0.0
      %789 = vmatpush2.msra.mxu0 0.0
      %790 = vmatprep.subr.mxu0 0.0
      %791 = vmatpush2.msra.mxu0 0.0
      %792 = vmatprep.subr.mxu0 0.0
      %793 = vmatpush2.msra.mxu0 0.0
      %794 = vmatprep.subr.mxu0 0.0
      %795 = vmatpush2.msra.mxu0 0.0
      %796 = vmatprep.subr.mxu0 0.0
      %797 = vmatpush2.msra.mxu0 0.0
      %798 = vmatprep.subr.mxu0 0.0
      %799 = vmatpush2.msra.mxu0 0.0
      %800 = vmatprep.subr.mxu0 0.0
      %801 = vmatpush2.msra.mxu0 0.0
      %802 = vmatprep.mubr.f32.mxu0 0.0
      %803 = vmatmul.mubr.f32.gmra.mxu0 %v736
      %v804 = vpop.f32.mrf.mxu0
      %v805 = vadd.f32 %v733, %v804
      %v806 = vpop.f32.mrf.mxu0
      %807 = vdwg.mxu0
      %v808 = vadd.f32 %v726, %v805
      %v809 = vxor.u32 %v808, 2147483648
      %v810 = vmul.f32 %v809, 1.442695
      %v811 = vpow.pop %v810
      %v812 = vadd.f32 %v811, 1.0
      %v813 = vrcp.pop %v812
      %v814 = vmul.f32 1.0, %v813
      %816 = vrot.lane.b32.xlu0 %v805, 64
      %v817 = vpop.permute.xlu0 %816
      %v819 = vmul.f32 %v814, %v817
      %821 = vrot.lane.b32.xlu0 %v819, 64
      %v822 = vpop.permute.xlu0 %821
      %v824 = vadd.f32 %v726, %v822
      %v825 = vtanh.pop %v824
      %v826 = vsub.f32 1.0, %v814
      %828 = vrot.lane.b32.xlu0 %v825, 96
      %v829 = vpop.permute.xlu0 %828
      %v831 = vmul.f32 %v826, %v829
      %832 = vrot.lane.b32.xlu0 %v565, 32
      %v833 = vpop.permute.xlu0 %832
      %v835 = vmul.f32 %v814, %v833
      %v836 = vadd.f32 %v831, %v835
      %838 = vrot.lane.b32.xlu0 %v836, 96
      %v839 = vpop.permute.xlu0 %838
      %841 = vst.msk [vmem:[#allocation2] sm:$0xff] %vm734, %v839
      %v842 = vld [vmem:[%s9] sm:$0xff]
      %v843 = vld [vmem:[%s9 + $0x8] sm:$0xff]
      %v844 = vld [vmem:[%s10] sm:$0xff]
      %v845 = vld [vmem:[%s10 + $0x8] sm:$0xff]
      %v846 = vld [vmem:[%s10 + $0x10] sm:$0xff]
      %v847 = vld [vmem:[%s10 + $0x18] sm:$0xff]
      %v848 = vsel %vm734, %v839, 0
      %850 = vmatprep.subr.mxu0 0.0
      %851 = vmatpush1.msra.mxu0 0.0
      %852 = vmatprep.subr.mxu0 0.0
      %853 = vmatpush1.msra.mxu0 0.0
      %854 = vmatprep.subr.mxu0 0.0
      %855 = vmatpush1.msra.mxu0 0.0
      %856 = vmatprep.subr.mxu0 0.0
      %857 = vmatpush1.msra.mxu0 0.0
      %858 = vmatprep.subr.mxu0 0.0
      %859 = vmatpush1.msra.mxu0 0.0
      %860 = vmatprep.subr.mxu0 0.0
      %861 = vmatpush1.msra.mxu0 0.0
      %862 = vmatprep.subr.mxu0 0.0
      %863 = vmatpush1.msra.mxu0 0.0
      %864 = vmatprep.subr.mxu0 0.0
      %865 = vmatpush1.msra.mxu0 0.0
      %866 = vmatprep.subr.mxu0 0.0
      %867 = vmatpush1.msra.mxu0 0.0
      %868 = vmatprep.subr.mxu0 0.0
      %869 = vmatpush1.msra.mxu0 0.0
      %870 = vmatprep.subr.mxu0 0.0
      %871 = vmatpush1.msra.mxu0 0.0
      %872 = vmatprep.subr.mxu0 0.0
      %873 = vmatpush1.msra.mxu0 0.0
      %874 = vmatprep.subr.mxu0 0.0
      %875 = vmatpush1.msra.mxu0 %v847
      %876 = vmatprep.subr.mxu0 0.0
      %877 = vmatpush1.msra.mxu0 %v846
      %878 = vmatprep.subr.mxu0 0.0
      %879 = vmatpush1.msra.mxu0 %v845
      %880 = vmatprep.subr.mxu0 0.0
      %881 = vmatpush1.msra.mxu0 %v844
      %882 = vmatprep.subr.mxu0 0.0
      %883 = vmatpush2.msra.mxu0 0.0
      %884 = vmatprep.subr.mxu0 0.0
      %885 = vmatpush2.msra.mxu0 0.0
      %886 = vmatprep.subr.mxu0 0.0
      %887 = vmatpush2.msra.mxu0 0.0
      %888 = vmatprep.subr.mxu0 0.0
      %889 = vmatpush2.msra.mxu0 0.0
      %890 = vmatprep.subr.mxu0 0.0
      %891 = vmatpush2.msra.mxu0 0.0
      %892 = vmatprep.subr.mxu0 0.0
      %893 = vmatpush2.msra.mxu0 0.0
      %894 = vmatprep.subr.mxu0 0.0
      %895 = vmatpush2.msra.mxu0 0.0
      %896 = vmatprep.subr.mxu0 0.0
      %897 = vmatpush2.msra.mxu0 0.0
      %898 = vmatprep.subr.mxu0 0.0
      %899 = vmatpush2.msra.mxu0 0.0
      %900 = vmatprep.subr.mxu0 0.0
      %901 = vmatpush2.msra.mxu0 0.0
      %902 = vmatprep.subr.mxu0 0.0
      %903 = vmatpush2.msra.mxu0 0.0
      %904 = vmatprep.subr.mxu0 0.0
      %905 = vmatpush2.msra.mxu0 0.0
      %906 = vmatprep.subr.mxu0 0.0
      %907 = vmatpush2.msra.mxu0 0.0
      %908 = vmatprep.subr.mxu0 0.0
      %909 = vmatpush2.msra.mxu0 0.0
      %910 = vmatprep.subr.mxu0 0.0
      %911 = vmatpush2.msra.mxu0 0.0
      %912 = vmatprep.subr.mxu0 0.0
      %913 = vmatpush2.msra.mxu0 0.0
      %914 = vmatprep.mubr.f32.mxu0 0.0
      %915 = vmatmul.mubr.f32.gmra.mxu0 %v848
      %v916 = vpop.f32.mrf.mxu0
      %v917 = vadd.f32 0.0, %v916
      %v918 = vpop.f32.mrf.mxu0
      %919 = vdwg.mxu0
      %920 = vmatprep.subr.mxu0 0.0
      %921 = vmatpush1.msra.mxu0 0.0
      %922 = vmatprep.subr.mxu0 0.0
      %923 = vmatpush1.msra.mxu0 0.0
      %924 = vmatprep.subr.mxu0 0.0
      %925 = vmatpush1.msra.mxu0 0.0
      %926 = vmatprep.subr.mxu0 0.0
      %927 = vmatpush1.msra.mxu0 0.0
      %928 = vmatprep.subr.mxu0 0.0
      %929 = vmatpush1.msra.mxu0 0.0
      %930 = vmatprep.subr.mxu0 0.0
      %931 = vmatpush1.msra.mxu0 0.0
      %932 = vmatprep.subr.mxu0 0.0
      %933 = vmatpush1.msra.mxu0 0.0
      %934 = vmatprep.subr.mxu0 0.0
      %935 = vmatpush1.msra.mxu0 0.0
      %936 = vmatprep.subr.mxu0 0.0
      %937 = vmatpush1.msra.mxu0 0.0
      %938 = vmatprep.subr.mxu0 0.0
      %939 = vmatpush1.msra.mxu0 0.0
      %940 = vmatprep.subr.mxu0 0.0
      %941 = vmatpush1.msra.mxu0 0.0
      %942 = vmatprep.subr.mxu0 0.0
      %943 = vmatpush1.msra.mxu0 0.0
      %944 = vmatprep.subr.mxu0 0.0
      %945 = vmatpush1.msra.mxu0 0.0
      %946 = vmatprep.subr.mxu0 0.0
      %947 = vmatpush1.msra.mxu0 0.0
      %948 = vmatprep.subr.mxu0 0.0
      %949 = vmatpush1.msra.mxu0 %v843
      %950 = vmatprep.subr.mxu0 0.0
      %951 = vmatpush1.msra.mxu0 %v842
      %952 = vmatprep.subr.mxu0 0.0
      %953 = vmatpush2.msra.mxu0 0.0
      %954 = vmatprep.subr.mxu0 0.0
      %955 = vmatpush2.msra.mxu0 0.0
      %956 = vmatprep.subr.mxu0 0.0
      %957 = vmatpush2.msra.mxu0 0.0
      %958 = vmatprep.subr.mxu0 0.0
      %959 = vmatpush2.msra.mxu0 0.0
      %960 = vmatprep.subr.mxu0 0.0
      %961 = vmatpush2.msra.mxu0 0.0
      %962 = vmatprep.subr.mxu0 0.0
      %963 = vmatpush2.msra.mxu0 0.0
      %964 = vmatprep.subr.mxu0 0.0
      %965 = vmatpush2.msra.mxu0 0.0
      %966 = vmatprep.subr.mxu0 0.0
      %967 = vmatpush2.msra.mxu0 0.0
      %968 = vmatprep.subr.mxu0 0.0
      %969 = vmatpush2.msra.mxu0 0.0
      %970 = vmatprep.subr.mxu0 0.0
      %971 = vmatpush2.msra.mxu0 0.0
      %972 = vmatprep.subr.mxu0 0.0
      %973 = vmatpush2.msra.mxu0 0.0
      %974 = vmatprep.subr.mxu0 0.0
      %975 = vmatpush2.msra.mxu0 0.0
      %976 = vmatprep.subr.mxu0 0.0
      %977 = vmatpush2.msra.mxu0 0.0
      %978 = vmatprep.subr.mxu0 0.0
      %979 = vmatpush2.msra.mxu0 0.0
      %980 = vmatprep.subr.mxu0 0.0
      %981 = vmatpush2.msra.mxu0 0.0
      %982 = vmatprep.subr.mxu0 0.0
      %983 = vmatpush2.msra.mxu0 0.0
      %984 = vmatprep.mubr.f32.mxu0 0.0
      %985 = vmatmul.mubr.f32.gmra.mxu0 %v657
      %v986 = vpop.f32.mrf.mxu0
      %v987 = vadd.f32 %v917, %v986
      %v988 = vpop.f32.mrf.mxu0
      %989 = vdwg.mxu0
      %v990 = vld [vmem:[#allocation5] sm:$0xff]
      %v991 = vadd.f32 %v987, %v990
      %992 = vst [vmem:[%s398] sm:$0xff] %v991
      %993 = vmax.xlane.f32.xlu0 %v991
      %v994 = vpop.xlane.xlu0 %993
      %v995 = vlaneseq
      %v996 = vand.u32 %v995, 127
      %vm997 = vcmp.eq.f32.partialorder %v991, %v994
      %v998 = vsel %vm997, %v996, 128
      %v999 = vand.u32 %v998, 65535
      %v1000 = vshra.s32 %v998, 16
      %v1001 = vcvt.s32.f32 %v999
      %v1002 = vcvt.s32.f32 %v1000
      %1003 = vmin.xlane.f32.xlu0 %v1002
      %v1004 = vpop.xlane.xlu0 %1003
      %vm1005 = vcmp.eq.f32.partialorder %v1002, %v1004
      %v1006 = vsel %vm1005, %v1001, inf
      %1007 = vmin.xlane.f32.xlu0 %v1006
      %v1008 = vpop.xlane.xlu0 %1007
      %v1009 = vcvt.f32.s32 %v1008
      %v1010 = vcvt.f32.s32 %v1004
      %v1011 = vshll.u32 %v1010, 16
      %v1012 = vadd.s32 %v1011, %v1009
      %vm1013 = vcmp.eq.s32.totalorder %v996, %v1012
      %v1014 = vsel %vm1013, 1, 0
      %v1015 = vcvt.s32.f32 %v1014
      %s1016 = sadd.s32 %s30, 1
      %s1017 = smul.u32 %s1016, 8
      %s1018 = scalar_lea.vmem %s1, %s1017
      %v1019 = vld [vmem:[%s1018] sm:$0xff]
      %s1020 = sld [smem:[#allocation7 + %s30]]
      %p1021 = scmp.gt.s32.totalorder %s1020, 0
      %s1022 = scalar_select %p1021, 1, 0
      %s1023 = scvt.s32.f32 %s1022
      %v1024 = vstv %s1023
      %v1025 = vmul.f32 %v1024, %v1019
      %s1026 = ssub.f32 1.0, %s1023
      %v1027 = vstv %s1026
      %v1028 = vmul.f32 %v1027, %v1015
      %v1029 = vadd.f32 %v1025, %v1028
      %1030 = vst [vmem:[#allocation3] sm:$0xff] %v1029
      %p1031 = scmp.lt.s32.totalorder %s30, 6
      %s1032 = scalar_select %p1031, %s30, 6
      %s1033 = smul.addr %s1032, 8
      %s1034 = scalar_lea.vmem %s13, %s1033
      // Predicated region
      $region73: #{seq2seq_forward.3} parent=67 // pred_check
        %p1035 = pneg %p300
      $region74: #{seq2seq_forward.3} parent=67 // pred_check_branch
        %1037 = sbr.rel (%p1035) target = $region76
      $region75: #{seq2seq_forward.3} parent=67 // pred_region
        _
      $region76: #{seq2seq_forward.3} parent=67 // pred_fallthru
        _
    $region68: #{seq2seq_forward.3} parent=5 // pred_fallthru
      _
    %p1038 = scmp.le.s32.totalorder 2, %s25
    // Predicated region
    $region77: #{seq2seq_forward.3} parent=5 // pred_check
      %p1039 = pneg %p1038
    $region78: #{seq2seq_forward.3} parent=5 // pred_check_branch
      %1041 = sbr.rel (%p1039) target = $region80
    $region79: #{seq2seq_forward.3} parent=5 // pred_region
      %s1042 = ssub.s32 %s25, 2
      // Predicated region
      $region81: #{seq2seq_forward.3} parent=79 // pred_check
        %p1043 = pneg %p306
      $region82: #{seq2seq_forward.3} parent=79 // pred_check_branch
        %1045 = sbr.rel (%p1043) target = $region84
      $region83: #{seq2seq_forward.3} parent=79 // pred_region
        %p1046 = scmp.lt.s32.totalorder %s31, 6
        %s1047 = scalar_select %p1046, %s31, 6
        %s1048 = smul.addr %s1047, 8
        %s1049 = scalar_lea.vmem %s13, %s1048
      $region84: #{seq2seq_forward.3} parent=79 // pred_fallthru
        _
    $region80: #{seq2seq_forward.3} parent=5 // pred_fallthru
      _
  $region6: #{seq2seq_forward.3} parent=0 // loop_footer
    %s29 = sadd.s32 1, %s25
  $region7: #{seq2seq_forward.3} parent=0 // loop_footer_branch
    %24 = sbr.rel target = $region3
  $region8: #{seq2seq_forward.3} parent=0 // loop_exit
    _

</llo_original>
